<compile_context>
chip_gen: v6e
topology: v6e:2x2x1
jax: 0.10.0
libtpu: 0.0.40
codegen_flags: <defaults>
</compile_context>

<pallas_src>
import jax
import jax.numpy as jnp
from jax.experimental import pallas as pl
from jax.experimental.pallas import tpu as pltpu

LANE = 128
SUBLANE_BF16 = 16


def _round_up(v, m):
    return ((v + m - 1) // m) * m


def _mlp_logsoftmax_kernel(x_ref,
                           w1_ref, b1_ref,
                           w2_ref, b2_ref,
                           w3_ref, b3_ref,
                           w4_ref, b4_ref,
                           out_ref):
    """Fused 4-layer MLP + ReLU + LogSoftmax over one batch tile.

    MXU inputs: bf16.  Accumulation + elementwise: f32.  Dropout is identity
    in eval mode, so it is omitted.
    """
    x = x_ref[...].astype(jnp.bfloat16)

    # Linear(input_size, hidden) + ReLU
    h = jnp.dot(x, w1_ref[...], preferred_element_type=jnp.float32) + b1_ref[...]
    h = jnp.maximum(h, 0.0).astype(jnp.bfloat16)

    # Linear(hidden, 2*hidden) + ReLU
    h = jnp.dot(h, w2_ref[...], preferred_element_type=jnp.float32) + b2_ref[...]
    h = jnp.maximum(h, 0.0).astype(jnp.bfloat16)

    # Linear(2*hidden, hidden) + ReLU
    h = jnp.dot(h, w3_ref[...], preferred_element_type=jnp.float32) + b3_ref[...]
    h = jnp.maximum(h, 0.0).astype(jnp.bfloat16)

    # Linear(hidden, output_size_padded)
    logits = jnp.dot(h, w4_ref[...], preferred_element_type=jnp.float32) + b4_ref[...]

    # LogSoftmax(dim=-1).  Padded output columns carry bias = -1e30, so their
    # exp underflows to 0 and the log-softmax over the lane-dense padded tile
    # equals the one over the true out_size columns.
    m = jnp.max(logits, axis=-1, keepdims=True)
    lse = jnp.log(jnp.sum(jnp.exp(logits - m), axis=-1, keepdims=True)) + m
    out_ref[...] = (logits - lse).astype(out_ref.dtype)


def linear_classifier_forward(x, params, out_size, *, batch_tile=512):
    """x: (B, input_size) (already encoded + flattened). Returns (B, out_size) f32."""
    B, in_size = x.shape
    in_pad = params["w1"].shape[0]
    out_pad = params["w4"].shape[1]

    # Batch tile: multiple of 16 (bf16 sublane packing); don't exceed the
    # (rounded-up) batch.  With B >= 2*batch_tile the grid has >= 2 steps, so
    # the x-tile DMA pipelines and megacore can shard the batch axis.
    batch_tile = max(SUBLANE_BF16, min(batch_tile, _round_up(B, SUBLANE_BF16)))
    batch_tile = _round_up(batch_tile, SUBLANE_BF16)
    B_pad = _round_up(B, batch_tile)

    # Zero-pad ragged batch rows / feature columns only when needed (no-op copy
    # otherwise).  Padded x columns hit zero weight rows -> exact.
    if B_pad != B or in_pad != in_size:
        x = jnp.pad(x, ((0, B_pad - B), (0, in_pad - in_size)))

    # Weights/biases are grid-invariant (constant index_map) -> fetched once.
    full = lambda arr: pl.BlockSpec(arr.shape, lambda i: (0,) * arr.ndim)

    out = pl.pallas_call(
        _mlp_logsoftmax_kernel,
        out_shape=jax.ShapeDtypeStruct((B_pad, out_pad), jnp.float32),
        grid=(B_pad // batch_tile,),
        in_specs=[
            pl.BlockSpec((batch_tile, in_pad), lambda i: (i, 0)),   # x tile
            full(params["w1"]), full(params["b1"]),
            full(params["w2"]), full(params["b2"]),
            full(params["w3"]), full(params["b3"]),
            full(params["w4"]), full(params["b4"]),
        ],
        out_specs=pl.BlockSpec((batch_tile, out_pad), lambda i: (i, 0)),
        compiler_params=pltpu.CompilerParams(
            dimension_semantics=("parallel",)),
    )(x,
      params["w1"], params["b1"],
      params["w2"], params["b2"],
      params["w3"], params["b3"],
      params["w4"], params["b4"])

    return out[:B, :out_size]


def init_params(key, input_size, hidden_size, output_size):
    """PyTorch-style init (U[-1/sqrt(fan_in), 1/sqrt(fan_in)]).

    Weights stored as (in_features, out_features) — transposed vs nn.Linear —
    cast to bf16, biases kept f32.  Every dimension is zero-padded to a
    multiple of 128 lanes (pad weights/biases = 0), except the final bias,
    which is padded with -1e30 so padded logits vanish in the log-softmax.
    """
    dims = [(input_size, hidden_size),
            (hidden_size, hidden_size * 2),
            (hidden_size * 2, hidden_size),
            (hidden_size, output_size)]
    params = {}
    for idx, (fan_in, fan_out) in enumerate(dims, start=1):
        key, kw, kb = jax.random.split(key, 3)
        bound = 1.0 / (fan_in ** 0.5)
        w = jax.random.uniform(kw, (fan_in, fan_out), jnp.float32,
                               minval=-bound, maxval=bound)
        b = jax.random.uniform(kb, (1, fan_out), jnp.float32,
                               minval=-bound, maxval=bound)
        fi_pad = _round_up(fan_in, LANE)
        fo_pad = _round_up(fan_out, LANE)
        w = jnp.pad(w, ((0, fi_pad - fan_in), (0, fo_pad - fan_out)))
        b = jnp.pad(b, ((0, 0), (0, fo_pad - fan_out)),
                    constant_values=(-1e30 if idx == 4 else 0.0))
        params[f"w{idx}"] = w.astype(jnp.bfloat16)
        params[f"b{idx}"] = b  # f32
    return params


def _reference_forward(x, p, dims):
    """Pure-JAX reference on the UNPADDED slices, same bf16-in / f32-acc path."""
    (in_size, h), (_, h2), (_, h3), (_, out_size) = dims

    def layer(a, w, b, fi, fo):
        y = jnp.dot(a, w[:fi, :fo], preferred_element_type=jnp.float32) + b[:, :fo]
        return jnp.maximum(y, 0.0).astype(jnp.bfloat16)

    a = layer(x.astype(jnp.bfloat16), p["w1"], p["b1"], in_size, h)
    a = layer(a, p["w2"], p["b2"], h, h2)
    a = layer(a, p["w3"], p["b3"], h2, h3)
    logits = jnp.dot(a, p["w4"][:h3, :out_size],
                     preferred_element_type=jnp.float32) + p["b4"][:, :out_size]
    return jax.nn.log_softmax(logits, axis=-1)


if __name__ == "__main__":
    # Small config implied by the module: config.input_size, hidden_size, output_size.
    batch = 256          # small, but gives a 2-step pipelined / megacore-shardable grid
    input_size = 128
    hidden_size = 32
    output_size = 16

    key = jax.random.PRNGKey(0)
    key, kx = jax.random.split(key)
    # x represents the already-encoded & flattened features (see TODO above).
    x = jax.random.normal(kx, (batch, input_size), jnp.float32)

    params = init_params(key, input_size, hidden_size, output_size)

    out = linear_classifier_forward(x, params, output_size, batch_tile=128)
    out = jax.block_until_ready(out)

    dims = [(input_size, hidden_size),
            (hidden_size, hidden_size * 2),
            (hidden_size * 2, hidden_size),
            (hidden_size, output_size)]
    ref = _reference_forward(x, params, dims)

    assert out.shape == (batch, output_size)
    assert jnp.allclose(out, ref, atol=2e-3, rtol=2e-3), "mismatch vs JAX reference"
    # log-softmax rows should sum to ~1 in prob space
    assert jnp.allclose(jnp.exp(out).sum(-1), 1.0, atol=1e-3)

    print("KERNEL_OK")
</pallas_src>

<mosaic_0001>
module attributes {stable_mosaic.version = 11 : i64} {
  func.func @_mlp_logsoftmax_kernel(%arg0: i32, %arg1: memref<128x128xf32, #tpu.memory_space<vmem>>, %arg2: memref<128x128xbf16, #tpu.memory_space<vmem>>, %arg3: memref<1x128xf32, #tpu.memory_space<vmem>>, %arg4: memref<128x128xbf16, #tpu.memory_space<vmem>>, %arg5: memref<1x128xf32, #tpu.memory_space<vmem>>, %arg6: memref<128x128xbf16, #tpu.memory_space<vmem>>, %arg7: memref<1x128xf32, #tpu.memory_space<vmem>>, %arg8: memref<128x128xbf16, #tpu.memory_space<vmem>>, %arg9: memref<1x128xf32, #tpu.memory_space<vmem>>, %arg10: memref<128x128xf32, #tpu.memory_space<vmem>>) attributes {dimension_semantics = [#tpu.dimension_semantics<parallel>], iteration_bounds = array<i64: 2>, scalar_prefetch = 0 : i64, scratch_operands = 0 : i64, tpu.core_type = #tpu.core_type<tc>, window_params = [{transform_indices = @transform_0, window_bounds = array<i64: 128, 128>}, {pipeline_mode = #tpu.pipeline_mode<synchronous>, transform_indices = @transform_1, window_bounds = array<i64: 128, 128>}, {pipeline_mode = #tpu.pipeline_mode<synchronous>, transform_indices = @transform_2, window_bounds = array<i64: 1, 128>}, {pipeline_mode = #tpu.pipeline_mode<synchronous>, transform_indices = @transform_3, window_bounds = array<i64: 128, 128>}, {pipeline_mode = #tpu.pipeline_mode<synchronous>, transform_indices = @transform_4, window_bounds = array<i64: 1, 128>}, {pipeline_mode = #tpu.pipeline_mode<synchronous>, transform_indices = @transform_5, window_bounds = array<i64: 128, 128>}, {pipeline_mode = #tpu.pipeline_mode<synchronous>, transform_indices = @transform_6, window_bounds = array<i64: 1, 128>}, {pipeline_mode = #tpu.pipeline_mode<synchronous>, transform_indices = @transform_7, window_bounds = array<i64: 128, 128>}, {pipeline_mode = #tpu.pipeline_mode<synchronous>, transform_indices = @transform_8, window_bounds = array<i64: 1, 128>}, {transform_indices = @transform_9, window_bounds = array<i64: 128, 128>}]} {
    %c0 = arith.constant 0 : index
    %c0_0 = arith.constant 0 : index
    %0 = vector.load %arg1[%c0, %c0_0] : memref<128x128xf32, #tpu.memory_space<vmem>>, vector<128x128xf32>
    %1 = arith.truncf %0 : vector<128x128xf32> to vector<128x128xbf16>
    %c0_1 = arith.constant 0 : index
    %c0_2 = arith.constant 0 : index
    %2 = vector.load %arg2[%c0_1, %c0_2] : memref<128x128xbf16, #tpu.memory_space<vmem>>, vector<128x128xbf16>
    %cst = arith.constant dense<0.000000e+00> : vector<128x128xf32>
    %3 = tpu.matmul %1, %2, %cst {dimension_numbers = #tpu.dot_dimension_numbers<[1], [0], [0], [1], [0, 0, 1, 1], [], []>} : vector<128x128xbf16>, vector<128x128xbf16>, vector<128x128xf32> -> vector<128x128xf32>
    %c0_3 = arith.constant 0 : index
    %c0_4 = arith.constant 0 : index
    %4 = vector.load %arg3[%c0_3, %c0_4] : memref<1x128xf32, #tpu.memory_space<vmem>>, vector<1x128xf32>
    %5 = vector.broadcast %4 : vector<1x128xf32> to vector<128x128xf32>
    %6 = arith.addf %3, %5 : vector<128x128xf32>
    %cst_5 = arith.constant 0.000000e+00 : f32
    %7 = vector.broadcast %cst_5 : f32 to vector<128x128xf32>
    %8 = arith.maximumf %6, %7 : vector<128x128xf32>
    %9 = arith.truncf %8 : vector<128x128xf32> to vector<128x128xbf16>
    %c0_6 = arith.constant 0 : index
    %c0_7 = arith.constant 0 : index
    %10 = vector.load %arg4[%c0_6, %c0_7] : memref<128x128xbf16, #tpu.memory_space<vmem>>, vector<128x128xbf16>
    %cst_8 = arith.constant dense<0.000000e+00> : vector<128x128xf32>
    %11 = tpu.matmul %9, %10, %cst_8 {dimension_numbers = #tpu.dot_dimension_numbers<[1], [0], [0], [1], [0, 0, 1, 1], [], []>} : vector<128x128xbf16>, vector<128x128xbf16>, vector<128x128xf32> -> vector<128x128xf32>
    %c0_9 = arith.constant 0 : index
    %c0_10 = arith.constant 0 : index
    %12 = vector.load %arg5[%c0_9, %c0_10] : memref<1x128xf32, #tpu.memory_space<vmem>>, vector<1x128xf32>
    %13 = vector.broadcast %12 : vector<1x128xf32> to vector<128x128xf32>
    %14 = arith.addf %11, %13 : vector<128x128xf32>
    %cst_11 = arith.constant 0.000000e+00 : f32
    %15 = vector.broadcast %cst_11 : f32 to vector<128x128xf32>
    %16 = arith.maximumf %14, %15 : vector<128x128xf32>
    %17 = arith.truncf %16 : vector<128x128xf32> to vector<128x128xbf16>
    %c0_12 = arith.constant 0 : index
    %c0_13 = arith.constant 0 : index
    %18 = vector.load %arg6[%c0_12, %c0_13] : memref<128x128xbf16, #tpu.memory_space<vmem>>, vector<128x128xbf16>
    %cst_14 = arith.constant dense<0.000000e+00> : vector<128x128xf32>
    %19 = tpu.matmul %17, %18, %cst_14 {dimension_numbers = #tpu.dot_dimension_numbers<[1], [0], [0], [1], [0, 0, 1, 1], [], []>} : vector<128x128xbf16>, vector<128x128xbf16>, vector<128x128xf32> -> vector<128x128xf32>
    %c0_15 = arith.constant 0 : index
    %c0_16 = arith.constant 0 : index
    %20 = vector.load %arg7[%c0_15, %c0_16] : memref<1x128xf32, #tpu.memory_space<vmem>>, vector<1x128xf32>
    %21 = vector.broadcast %20 : vector<1x128xf32> to vector<128x128xf32>
    %22 = arith.addf %19, %21 : vector<128x128xf32>
    %cst_17 = arith.constant 0.000000e+00 : f32
    %23 = vector.broadcast %cst_17 : f32 to vector<128x128xf32>
    %24 = arith.maximumf %22, %23 : vector<128x128xf32>
    %25 = arith.truncf %24 : vector<128x128xf32> to vector<128x128xbf16>
    %c0_18 = arith.constant 0 : index
    %c0_19 = arith.constant 0 : index
    %26 = vector.load %arg8[%c0_18, %c0_19] : memref<128x128xbf16, #tpu.memory_space<vmem>>, vector<128x128xbf16>
    %cst_20 = arith.constant dense<0.000000e+00> : vector<128x128xf32>
    %27 = tpu.matmul %25, %26, %cst_20 {dimension_numbers = #tpu.dot_dimension_numbers<[1], [0], [0], [1], [0, 0, 1, 1], [], []>} : vector<128x128xbf16>, vector<128x128xbf16>, vector<128x128xf32> -> vector<128x128xf32>
    %c0_21 = arith.constant 0 : index
    %c0_22 = arith.constant 0 : index
    %28 = vector.load %arg9[%c0_21, %c0_22] : memref<1x128xf32, #tpu.memory_space<vmem>>, vector<1x128xf32>
    %29 = vector.broadcast %28 : vector<1x128xf32> to vector<128x128xf32>
    %30 = arith.addf %27, %29 : vector<128x128xf32>
    %cst_23 = arith.constant dense<0xFF800000> : vector<128xf32>
    %31 = vector.multi_reduction <maximumf>, %30, %cst_23 [1] : vector<128x128xf32> to vector<128xf32>
    %32 = vector.shape_cast %31 : vector<128xf32> to vector<128x1xf32>
    %33 = vector.broadcast %32 : vector<128x1xf32> to vector<128x128xf32>
    %34 = arith.subf %30, %33 : vector<128x128xf32>
    %35 = math.exp %34 : vector<128x128xf32>
    %cst_24 = arith.constant dense<0.000000e+00> : vector<128xf32>
    %36 = vector.multi_reduction <add>, %35, %cst_24 [1] : vector<128x128xf32> to vector<128xf32>
    %37 = vector.shape_cast %36 : vector<128xf32> to vector<128x1xf32>
    %38 = math.log %37 : vector<128x1xf32>
    %39 = arith.addf %38, %32 : vector<128x1xf32>
    %40 = vector.broadcast %39 : vector<128x1xf32> to vector<128x128xf32>
    %41 = arith.subf %30, %40 : vector<128x128xf32>
    %c0_25 = arith.constant 0 : index
    %c0_26 = arith.constant 0 : index
    %42 = vector.load %arg10[%c0_25, %c0_26] : memref<128x128xf32, #tpu.memory_space<vmem>>, vector<128x128xf32>
    tpu.vector_store %arg10[%c0_25, %c0_26], %41 {strides = array<i32>} : memref<128x128xf32, #tpu.memory_space<vmem>>, vector<128x128xf32>,
    return
  }
  func.func @transform_0(%arg0: i32) -> (i32, i32) {
    %c0_i32 = arith.constant 0 : i32
    %c0_i32_0 = arith.constant 0 : i32
    return %arg0, %c0_i32 : i32, i32
  }
  func.func @transform_1(%arg0: i32) -> (i32, i32) {
    %c0_i32 = arith.constant 0 : i32
    %c0_i32_0 = arith.constant 0 : i32
    %c0_i32_1 = arith.constant 0 : i32
    return %c0_i32, %c0_i32_0 : i32, i32
  }
  func.func @transform_2(%arg0: i32) -> (i32, i32) {
    %c0_i32 = arith.constant 0 : i32
    %c0_i32_0 = arith.constant 0 : i32
    %c0_i32_1 = arith.constant 0 : i32
    return %c0_i32, %c0_i32_0 : i32, i32
  }
  func.func @transform_3(%arg0: i32) -> (i32, i32) {
    %c0_i32 = arith.constant 0 : i32
    %c0_i32_0 = arith.constant 0 : i32
    %c0_i32_1 = arith.constant 0 : i32
    return %c0_i32, %c0_i32_0 : i32, i32
  }
  func.func @transform_4(%arg0: i32) -> (i32, i32) {
    %c0_i32 = arith.constant 0 : i32
    %c0_i32_0 = arith.constant 0 : i32
    %c0_i32_1 = arith.constant 0 : i32
    return %c0_i32, %c0_i32_0 : i32, i32
  }
  func.func @transform_5(%arg0: i32) -> (i32, i32) {
    %c0_i32 = arith.constant 0 : i32
    %c0_i32_0 = arith.constant 0 : i32
    %c0_i32_1 = arith.constant 0 : i32
    return %c0_i32, %c0_i32_0 : i32, i32
  }
  func.func @transform_6(%arg0: i32) -> (i32, i32) {
    %c0_i32 = arith.constant 0 : i32
    %c0_i32_0 = arith.constant 0 : i32
    %c0_i32_1 = arith.constant 0 : i32
    return %c0_i32, %c0_i32_0 : i32, i32
  }
  func.func @transform_7(%arg0: i32) -> (i32, i32) {
    %c0_i32 = arith.constant 0 : i32
    %c0_i32_0 = arith.constant 0 : i32
    %c0_i32_1 = arith.constant 0 : i32
    return %c0_i32, %c0_i32_0 : i32, i32
  }
  func.func @transform_8(%arg0: i32) -> (i32, i32) {
    %c0_i32 = arith.constant 0 : i32
    %c0_i32_0 = arith.constant 0 : i32
    %c0_i32_1 = arith.constant 0 : i32
    return %c0_i32, %c0_i32_0 : i32, i32
  }
  func.func @transform_9(%arg0: i32) -> (i32, i32) {
    %c0_i32 = arith.constant 0 : i32
    %c0_i32_0 = arith.constant 0 : i32
    return %arg0, %c0_i32 : i32, i32
  }
}

</mosaic_0001>

<llo_original>
// kernel: tpu_custom_call.1
$region0: #{tpu_custom_call.1}
  #allocation0 [shape = 'u32[]', space=smem, size = 0x4, offset = 0x4, fixed_abs, tag = 'smem constant byte address 0x4 - core index']
  #allocation1 [shape = 'u32[144,128]{1,0:T(1,128)}', space=vmem, size = 0x12000, scoped, tag = 'internal scratch']
  %s0 = inlined_call_operand.hbm [shape: f32[256,128], index: 0, kind: input, shape index: {}]
  %s1 = inlined_call_operand.hbm [shape: bf16[128,128], index: 1, kind: input, shape index: {}]
  %s2 = inlined_call_operand.vmem [shape: f32[1,128], index: 2, kind: input, shape index: {}]
  %s3 = inlined_call_operand.hbm [shape: bf16[128,128], index: 3, kind: input, shape index: {}]
  %s4 = inlined_call_operand.vmem [shape: f32[1,128], index: 4, kind: input, shape index: {}]
  %s5 = inlined_call_operand.hbm [shape: bf16[128,128], index: 5, kind: input, shape index: {}]
  %s6 = inlined_call_operand.vmem [shape: f32[1,128], index: 6, kind: input, shape index: {}]
  %s7 = inlined_call_operand.hbm [shape: bf16[128,128], index: 7, kind: input, shape index: {}]
  %s8 = inlined_call_operand.vmem [shape: f32[1,128], index: 8, kind: input, shape index: {}]
  %s9 = inlined_call_operand.hbm [shape: f32[256,128], index: 9, kind: output, shape index: {}]
  %s10 = sld [smem:[#allocation0]]
  $region89: #{tpu_custom_call.1} parent=0
    _
  %s12 = ssub.s32 1, %s10
  %s13 = scalar_select 0, %s12, %s10
  $region1: #{tpu_custom_call.1} parent=0
    #allocation2 [shape = 'u8[131072]{0}', space=vmem, size = 0x20000, scoped, tag = 'input window, operand 0']
    #allocation3 [shape = 's32[2]{0}', space=sflag, size = 0x8, scoped, tag = 'scoped memory for tpu_custom_call.1']
    #allocation4 [shape = 's32[2]{0}', space=sflag, size = 0x8, scoped, tag = 'scoped memory for tpu_custom_call.1']
    #allocation5 [shape = 'u8[32768]{0}', space=vmem, size = 0x8000, scoped, tag = 'input window, operand 1, single buffered']
    #allocation6 [shape = 's32[1]{0}', space=sflag, size = 0x4, scoped, tag = 'scoped memory for tpu_custom_call.1']
    #allocation7 [shape = 'u8[32768]{0}', space=vmem, size = 0x8000, scoped, tag = 'input window, operand 3, single buffered']
    #allocation8 [shape = 'u8[32768]{0}', space=vmem, size = 0x8000, scoped, tag = 'input window, operand 5, single buffered']
    #allocation9 [shape = 's32[1]{0}', space=sflag, size = 0x4, scoped, tag = 'scoped memory for tpu_custom_call.1']
    #allocation10 [shape = 'u8[32768]{0}', space=vmem, size = 0x8000, scoped, tag = 'input window, operand 7, single buffered']
    #allocation11 [shape = 'u8[131072]{0}', space=vmem, size = 0x20000, scoped, tag = 'output window, operand 0']
    %14 = vsyncpa [#allocation3], 0
    %s15 = scalar_lea.sflag [#allocation3], 1
    %16 = vsyncpa %s15, 0
    %17 = vsyncpa [#allocation6], 0
    %18 = vsyncpa [#allocation9], 0
    %19 = vsyncpa [#allocation4], 0
    %s20 = scalar_lea.sflag [#allocation4], 1
    %21 = vsyncpa %s20, 0
    loop: start=0, step=1, limit=4
    $region2: #{tpu_custom_call.1} parent=1 // loop_pre_header
      _
    $region3: #{tpu_custom_call.1} parent=1 // loop_header
      %s23 = sphi 0, %s27
      %p24 = scmp.ge.s32.totalorder %s23, 4
      %s33 = sphi 0, %s35
      %s36 = sphi 0, %s33
      %s37 = sphi 0, %s36
      %s53 = sphi 0, %s37
      %s57 = sphi 0, %s57
      %s59 = sphi 0, %s57
      %s60 = sphi 0, %s59
      %s74 = sphi 0, %s60
      %s78 = sphi 0, %s78
      %s80 = sphi 0, %s78
      %s81 = sphi 0, %s80
      %s95 = sphi 0, %s81
      %s99 = sphi 0, %s99
      %s101 = sphi 0, %s99
      %s102 = sphi 0, %s101
      %s116 = sphi 0, %s102
      %s120 = sphi 0, %s120
      %s122 = sphi 0, %s120
      %s123 = sphi 0, %s122
      %s137 = sphi 0, %s123
      %s141 = sphi 0, %s141
      %s143 = sphi 0, %s141
      %s144 = sphi 0, %s143
      %s158 = sphi 0, %s144
      %s162 = sphi 0, %s162
      %s164 = sphi 0, %s162
      %s165 = sphi 0, %s164
      %s179 = sphi 0, %s165
      %s183 = sphi 0, %s183
      %s185 = sphi 0, %s183
      %s186 = sphi 0, %s185
      %s200 = sphi 0, %s186
      %s204 = sphi 0, %s204
      %s206 = sphi 0, %s204
      %s207 = sphi 0, %s206
      %s221 = sphi 0, %s207
      %s227 = sphi 0, %s229
      %s230 = sphi 0, %s227
      %s231 = sphi 0, %s230
      %s247 = sphi 0, %s231
    $region4: #{tpu_custom_call.1} parent=1 // loop_header_branch
      %26 = sbr.rel (%p24) target = $region8
    $region5: #{tpu_custom_call.1} parent=1 // loop_body
      %s28 = ssub.s32 %s23, 1
      %s29 = ssub.s32 %s23, 2
      %s30 = sadd.s32 %s23, 1
      %s31 = ssub.s32 %s23, %s30
      %p32 = scmp.eq.s32.totalorder %s31, 0
      %s34 = sadd.s32 %s33, 1
      %s35 = scalar_select %p32, %s33, %s34
      %p38 = pneg %p32
      %p39 = scmp.eq.s32.totalorder %s23, 1
      %p40 = por %p38, %p39
      %p41 = scmp.ne.s32.totalorder %s33, %s36
      %p42 = scmp.eq.s32.totalorder %s23, 0
      %p43 = por %p41, %p42
      %p44 = scmp.ne.s32.totalorder %s33, %s36
      %p45 = scmp.eq.s32.totalorder %s28, 1
      %p46 = por %p44, %p45
      %p47 = scmp.ne.s32.totalorder %s36, %s37
      %p48 = scmp.eq.s32.totalorder %s28, 0
      %p49 = por %p47, %p48
      %p50 = scmp.ne.s32.totalorder %s36, %s37
      %p51 = scmp.eq.s32.totalorder %s29, 1
      %p52 = por %p50, %p51
      %p54 = scmp.ne.s32.totalorder %s37, %s53
      %p55 = scmp.eq.s32.totalorder %s29, 0
      %p56 = por %p54, %p55
      %s58 = sadd.s32 %s57, 1
      %p61 = scmp.eq.s32.totalorder %s23, 1
      %p62 = scmp.ne.s32.totalorder %s57, %s59
      %p63 = scmp.eq.s32.totalorder %s23, 0
      %p64 = por %p62, %p63
      %p65 = scmp.ne.s32.totalorder %s57, %s59
      %p66 = scmp.eq.s32.totalorder %s28, 1
      %p67 = por %p65, %p66
      %p68 = scmp.ne.s32.totalorder %s59, %s60
      %p69 = scmp.eq.s32.totalorder %s28, 0
      %p70 = por %p68, %p69
      %p71 = scmp.ne.s32.totalorder %s59, %s60
      %p72 = scmp.eq.s32.totalorder %s29, 1
      %p73 = por %p71, %p72
      %p75 = scmp.ne.s32.totalorder %s60, %s74
      %p76 = scmp.eq.s32.totalorder %s29, 0
      %p77 = por %p75, %p76
      %s79 = sadd.s32 %s78, 1
      %p82 = scmp.eq.s32.totalorder %s23, 1
      %p83 = scmp.ne.s32.totalorder %s78, %s80
      %p84 = scmp.eq.s32.totalorder %s23, 0
      %p85 = por %p83, %p84
      %p86 = scmp.ne.s32.totalorder %s78, %s80
      %p87 = scmp.eq.s32.totalorder %s28, 1
      %p88 = por %p86, %p87
      %p89 = scmp.ne.s32.totalorder %s80, %s81
      %p90 = scmp.eq.s32.totalorder %s28, 0
      %p91 = por %p89, %p90
      %p92 = scmp.ne.s32.totalorder %s80, %s81
      %p93 = scmp.eq.s32.totalorder %s29, 1
      %p94 = por %p92, %p93
      %p96 = scmp.ne.s32.totalorder %s81, %s95
      %p97 = scmp.eq.s32.totalorder %s29, 0
      %p98 = por %p96, %p97
      %s100 = sadd.s32 %s99, 1
      %p103 = scmp.eq.s32.totalorder %s23, 1
      %p104 = scmp.ne.s32.totalorder %s99, %s101
      %p105 = scmp.eq.s32.totalorder %s23, 0
      %p106 = por %p104, %p105
      %p107 = scmp.ne.s32.totalorder %s99, %s101
      %p108 = scmp.eq.s32.totalorder %s28, 1
      %p109 = por %p107, %p108
      %p110 = scmp.ne.s32.totalorder %s101, %s102
      %p111 = scmp.eq.s32.totalorder %s28, 0
      %p112 = por %p110, %p111
      %p113 = scmp.ne.s32.totalorder %s101, %s102
      %p114 = scmp.eq.s32.totalorder %s29, 1
      %p115 = por %p113, %p114
      %p117 = scmp.ne.s32.totalorder %s102, %s116
      %p118 = scmp.eq.s32.totalorder %s29, 0
      %p119 = por %p117, %p118
      %s121 = sadd.s32 %s120, 1
      %p124 = scmp.eq.s32.totalorder %s23, 1
      %p125 = scmp.ne.s32.totalorder %s120, %s122
      %p126 = scmp.eq.s32.totalorder %s23, 0
      %p127 = por %p125, %p126
      %p128 = scmp.ne.s32.totalorder %s120, %s122
      %p129 = scmp.eq.s32.totalorder %s28, 1
      %p130 = por %p128, %p129
      %p131 = scmp.ne.s32.totalorder %s122, %s123
      %p132 = scmp.eq.s32.totalorder %s28, 0
      %p133 = por %p131, %p132
      %p134 = scmp.ne.s32.totalorder %s122, %s123
      %p135 = scmp.eq.s32.totalorder %s29, 1
      %p136 = por %p134, %p135
      %p138 = scmp.ne.s32.totalorder %s123, %s137
      %p139 = scmp.eq.s32.totalorder %s29, 0
      %p140 = por %p138, %p139
      %s142 = sadd.s32 %s141, 1
      %p145 = scmp.eq.s32.totalorder %s23, 1
      %p146 = scmp.ne.s32.totalorder %s141, %s143
      %p147 = scmp.eq.s32.totalorder %s23, 0
      %p148 = por %p146, %p147
      %p149 = scmp.ne.s32.totalorder %s141, %s143
      %p150 = scmp.eq.s32.totalorder %s28, 1
      %p151 = por %p149, %p150
      %p152 = scmp.ne.s32.totalorder %s143, %s144
      %p153 = scmp.eq.s32.totalorder %s28, 0
      %p154 = por %p152, %p153
      %p155 = scmp.ne.s32.totalorder %s143, %s144
      %p156 = scmp.eq.s32.totalorder %s29, 1
      %p157 = por %p155, %p156
      %p159 = scmp.ne.s32.totalorder %s144, %s158
      %p160 = scmp.eq.s32.totalorder %s29, 0
      %p161 = por %p159, %p160
      %s163 = sadd.s32 %s162, 1
      %p166 = scmp.eq.s32.totalorder %s23, 1
      %p167 = scmp.ne.s32.totalorder %s162, %s164
      %p168 = scmp.eq.s32.totalorder %s23, 0
      %p169 = por %p167, %p168
      %p170 = scmp.ne.s32.totalorder %s162, %s164
      %p171 = scmp.eq.s32.totalorder %s28, 1
      %p172 = por %p170, %p171
      %p173 = scmp.ne.s32.totalorder %s164, %s165
      %p174 = scmp.eq.s32.totalorder %s28, 0
      %p175 = por %p173, %p174
      %p176 = scmp.ne.s32.totalorder %s164, %s165
      %p177 = scmp.eq.s32.totalorder %s29, 1
      %p178 = por %p176, %p177
      %p180 = scmp.ne.s32.totalorder %s165, %s179
      %p181 = scmp.eq.s32.totalorder %s29, 0
      %p182 = por %p180, %p181
      %s184 = sadd.s32 %s183, 1
      %p187 = scmp.eq.s32.totalorder %s23, 1
      %p188 = scmp.ne.s32.totalorder %s183, %s185
      %p189 = scmp.eq.s32.totalorder %s23, 0
      %p190 = por %p188, %p189
      %p191 = scmp.ne.s32.totalorder %s183, %s185
      %p192 = scmp.eq.s32.totalorder %s28, 1
      %p193 = por %p191, %p192
      %p194 = scmp.ne.s32.totalorder %s185, %s186
      %p195 = scmp.eq.s32.totalorder %s28, 0
      %p196 = por %p194, %p195
      %p197 = scmp.ne.s32.totalorder %s185, %s186
      %p198 = scmp.eq.s32.totalorder %s29, 1
      %p199 = por %p197, %p198
      %p201 = scmp.ne.s32.totalorder %s186, %s200
      %p202 = scmp.eq.s32.totalorder %s29, 0
      %p203 = por %p201, %p202
      %s205 = sadd.s32 %s204, 1
      %p208 = scmp.eq.s32.totalorder %s23, 1
      %p209 = scmp.ne.s32.totalorder %s204, %s206
      %p210 = scmp.eq.s32.totalorder %s23, 0
      %p211 = por %p209, %p210
      %p212 = scmp.ne.s32.totalorder %s204, %s206
      %p213 = scmp.eq.s32.totalorder %s28, 1
      %p214 = por %p212, %p213
      %p215 = scmp.ne.s32.totalorder %s206, %s207
      %p216 = scmp.eq.s32.totalorder %s28, 0
      %p217 = por %p215, %p216
      %p218 = scmp.ne.s32.totalorder %s206, %s207
      %p219 = scmp.eq.s32.totalorder %s29, 1
      %p220 = por %p218, %p219
      %p222 = scmp.ne.s32.totalorder %s207, %s221
      %p223 = scmp.eq.s32.totalorder %s29, 0
      %p224 = por %p222, %p223
      %s225 = ssub.s32 %s23, %s30
      %p226 = scmp.eq.s32.totalorder %s225, 0
      %s228 = sadd.s32 %s227, 1
      %s229 = scalar_select %p226, %s227, %s228
      %p232 = pneg %p226
      %p233 = scmp.eq.s32.totalorder %s23, 1
      %p234 = por %p232, %p233
      %p235 = scmp.ne.s32.totalorder %s227, %s230
      %p236 = scmp.eq.s32.totalorder %s23, 0
      %p237 = por %p235, %p236
      %p238 = scmp.ne.s32.totalorder %s227, %s230
      %p239 = scmp.eq.s32.totalorder %s28, 1
      %p240 = por %p238, %p239
      %p241 = scmp.ne.s32.totalorder %s230, %s231
      %p242 = scmp.eq.s32.totalorder %s28, 0
      %p243 = por %p241, %p242
      %p244 = scmp.ne.s32.totalorder %s230, %s231
      %p245 = scmp.eq.s32.totalorder %s29, 1
      %p246 = por %p244, %p245
      %p248 = scmp.ne.s32.totalorder %s231, %s247
      %p249 = scmp.eq.s32.totalorder %s29, 0
      %p250 = por %p248, %p249
      %p251 = scmp.le.s32.totalorder 1, %s23
      %p252 = scmp.lt.s32.totalorder %s23, 3
      %p253 = pnand %p251, %p252
      %p254 = pneg %p253
      // Predicated region
      $region9: #{tpu_custom_call.1} parent=5 // pred_check
        _
      $region10: #{tpu_custom_call.1} parent=5 // pred_check_branch
        %256 = sbr.rel (%p253) target = $region12
      $region11: #{tpu_custom_call.1} parent=5 // pred_region
        %s257 = ssub.s32 %s23, 1
        // Predicated region
        $region13: #{tpu_custom_call.1} parent=11 // pred_check
          %p258 = pneg %p70
        $region14: #{tpu_custom_call.1} parent=11 // pred_check_branch
          %260 = sbr.rel (%p258) target = $region16
        $region15: #{tpu_custom_call.1} parent=11 // pred_region
          %s262 = ssub.s32 1024, 1024
          %263 = vsyncadd [#allocation6], %s262
          %s264 = sshll.u32 [#allocation5], 4
          %s265 = int_to_ptr.vmem [resolvable:$true] %s264
          %270 = dma.hbm_to_vmem [thread:$0]  %s1, 1024, %s265, [#allocation6], 64, 64, 4
        $region16: #{tpu_custom_call.1} parent=11 // pred_fallthru
          _
        // Predicated region
        $region17: #{tpu_custom_call.1} parent=11 // pred_check
          %p271 = pneg %p91
        $region18: #{tpu_custom_call.1} parent=11 // pred_check_branch
          %273 = sbr.rel (%p271) target = $region20
        $region19: #{tpu_custom_call.1} parent=11 // pred_region
          _
        $region20: #{tpu_custom_call.1} parent=11 // pred_fallthru
          _
        // Predicated region
        $region21: #{tpu_custom_call.1} parent=11 // pred_check
          %p274 = pneg %p112
        $region22: #{tpu_custom_call.1} parent=11 // pred_check_branch
          %276 = sbr.rel (%p274) target = $region24
        $region23: #{tpu_custom_call.1} parent=11 // pred_region
          %s278 = ssub.s32 1024, 1024
          %279 = vsyncadd [#allocation6], %s278
          %s280 = sshll.u32 [#allocation7], 4
          %s281 = int_to_ptr.vmem [resolvable:$true] %s280
          %286 = dma.hbm_to_vmem [thread:$0]  %s3, 1024, %s281, [#allocation6], 64, 64, 4
        $region24: #{tpu_custom_call.1} parent=11 // pred_fallthru
          _
        // Predicated region
        $region25: #{tpu_custom_call.1} parent=11 // pred_check
          %p287 = pneg %p133
        $region26: #{tpu_custom_call.1} parent=11 // pred_check_branch
          %289 = sbr.rel (%p287) target = $region28
        $region27: #{tpu_custom_call.1} parent=11 // pred_region
          _
        $region28: #{tpu_custom_call.1} parent=11 // pred_fallthru
          _
        // Predicated region
        $region29: #{tpu_custom_call.1} parent=11 // pred_check
          %p290 = pneg %p154
        $region30: #{tpu_custom_call.1} parent=11 // pred_check_branch
          %292 = sbr.rel (%p290) target = $region32
        $region31: #{tpu_custom_call.1} parent=11 // pred_region
          %s294 = ssub.s32 1024, 1024
          %295 = vsyncadd [#allocation9], %s294
          %s296 = sshll.u32 [#allocation8], 4
          %s297 = int_to_ptr.vmem [resolvable:$true] %s296
          %302 = dma.hbm_to_vmem [thread:$0]  %s5, 1024, %s297, [#allocation9], 64, 64, 4
        $region32: #{tpu_custom_call.1} parent=11 // pred_fallthru
          _
        // Predicated region
        $region33: #{tpu_custom_call.1} parent=11 // pred_check
          %p303 = pneg %p175
        $region34: #{tpu_custom_call.1} parent=11 // pred_check_branch
          %305 = sbr.rel (%p303) target = $region36
        $region35: #{tpu_custom_call.1} parent=11 // pred_region
          _
        $region36: #{tpu_custom_call.1} parent=11 // pred_fallthru
          _
        // Predicated region
        $region37: #{tpu_custom_call.1} parent=11 // pred_check
          %p306 = pneg %p196
        $region38: #{tpu_custom_call.1} parent=11 // pred_check_branch
          %308 = sbr.rel (%p306) target = $region40
        $region39: #{tpu_custom_call.1} parent=11 // pred_region
          %s310 = ssub.s32 1024, 1024
          %311 = vsyncadd [#allocation9], %s310
          %s312 = sshll.u32 [#allocation10], 4
          %s313 = int_to_ptr.vmem [resolvable:$true] %s312
          %318 = dma.hbm_to_vmem [thread:$0]  %s7, 1024, %s313, [#allocation9], 64, 64, 4
        $region40: #{tpu_custom_call.1} parent=11 // pred_fallthru
          _
        // Predicated region
        $region41: #{tpu_custom_call.1} parent=11 // pred_check
          %p319 = pneg %p217
        $region42: #{tpu_custom_call.1} parent=11 // pred_check_branch
          %321 = sbr.rel (%p319) target = $region44
        $region43: #{tpu_custom_call.1} parent=11 // pred_region
          _
        $region44: #{tpu_custom_call.1} parent=11 // pred_fallthru
          _
      $region12: #{tpu_custom_call.1} parent=5 // pred_fallthru
        _
      %p322 = scmp.lt.s32.totalorder %s23, 2
      // Predicated region
      $region45: #{tpu_custom_call.1} parent=5 // pred_check
        %p323 = pneg %p322
      $region46: #{tpu_custom_call.1} parent=5 // pred_check_branch
        %325 = sbr.rel (%p323) target = $region48
      $region47: #{tpu_custom_call.1} parent=5 // pred_region
        // Predicated region
        $region49: #{tpu_custom_call.1} parent=47 // pred_check
          %p326 = pneg %p43
        $region50: #{tpu_custom_call.1} parent=47 // pred_check_branch
          %328 = sbr.rel (%p326) target = $region52
        $region51: #{tpu_custom_call.1} parent=47 // pred_region
          %s329 = sand.u32 %s33, 1
          %s330 = scalar_lea.sflag [#allocation3], %s329
          %s331 = sand.u32 %s33, 1
          %s332 = smul.addr %s331, 128
          %s333 = scalar_lea.vmem [#allocation2], %s332
          %s334 = smul.u32 16, %s23
          %s336 = ssub.s32 2048, 2048
          %337 = vsyncadd %s330, %s336
          %s338 = smul.addr %s334, 128
          %s339 = scalar_lea.hbm %s0, %s338
          %s340 = sshll.u32 %s333, 4
          %s341 = int_to_ptr.vmem [resolvable:$true] %s340
          %346 = dma.hbm_to_vmem [thread:$0]  %s339, 2048, %s341, %s330, 128, 128, 8
        $region52: #{tpu_custom_call.1} parent=47 // pred_fallthru
          _
      $region48: #{tpu_custom_call.1} parent=5 // pred_fallthru
        _
      %p347 = scmp.le.s32.totalorder 1, %s23
      %p348 = scmp.lt.s32.totalorder %s23, 3
      %p349 = pnand %p347, %p348
      %p350 = pneg %p349
      // Predicated region
      $region53: #{tpu_custom_call.1} parent=5 // pred_check
        _
      $region54: #{tpu_custom_call.1} parent=5 // pred_check_branch
        %352 = sbr.rel (%p349) target = $region56
      $region55: #{tpu_custom_call.1} parent=5 // pred_region
        %s353 = ssub.s32 %s23, 1
        %s354 = sand.u32 %s36, 1
        %s355 = scalar_lea.sflag [#allocation3], %s354
        %s356 = sand.u32 %s36, 1
        %s357 = smul.addr %s356, 128
        %s358 = scalar_lea.vmem [#allocation2], %s357
        // Predicated region
        $region57: #{tpu_custom_call.1} parent=55 // pred_check
          %p359 = pneg %p49
        $region58: #{tpu_custom_call.1} parent=55 // pred_check_branch
          %361 = sbr.rel (%p359) target = $region60
        $region59: #{tpu_custom_call.1} parent=55 // pred_region
          %362 = dma.done %s355, 2048
        $region60: #{tpu_custom_call.1} parent=55 // pred_fallthru
          _
        // Predicated region
        $region61: #{tpu_custom_call.1} parent=55 // pred_check
          %p363 = pneg %p70
        $region62: #{tpu_custom_call.1} parent=55 // pred_check_branch
          %365 = sbr.rel (%p363) target = $region64
        $region63: #{tpu_custom_call.1} parent=55 // pred_region
          %366 = dma.done [#allocation6], 1024
        $region64: #{tpu_custom_call.1} parent=55 // pred_fallthru
          _
        // Predicated region
        $region65: #{tpu_custom_call.1} parent=55 // pred_check
          %p367 = pneg %p112
        $region66: #{tpu_custom_call.1} parent=55 // pred_check_branch
          %369 = sbr.rel (%p367) target = $region68
        $region67: #{tpu_custom_call.1} parent=55 // pred_region
          %370 = dma.done [#allocation6], 1024
        $region68: #{tpu_custom_call.1} parent=55 // pred_fallthru
          _
        // Predicated region
        $region69: #{tpu_custom_call.1} parent=55 // pred_check
          %p371 = pneg %p154
        $region70: #{tpu_custom_call.1} parent=55 // pred_check_branch
          %373 = sbr.rel (%p371) target = $region72
        $region71: #{tpu_custom_call.1} parent=55 // pred_region
          %374 = dma.done [#allocation9], 1024
        $region72: #{tpu_custom_call.1} parent=55 // pred_fallthru
          _
        // Predicated region
        $region73: #{tpu_custom_call.1} parent=55 // pred_check
          %p375 = pneg %p196
        $region74: #{tpu_custom_call.1} parent=55 // pred_check_branch
          %377 = sbr.rel (%p375) target = $region76
        $region75: #{tpu_custom_call.1} parent=55 // pred_region
          %378 = dma.done [#allocation9], 1024
        $region76: #{tpu_custom_call.1} parent=55 // pred_fallthru
          _
        %s379 = sand.u32 %s36, 1
        %s380 = scalar_lea.sflag [#allocation3], %s379
        %s381 = sand.u32 %s36, 1
        %s382 = smul.addr %s381, 128
        %s383 = scalar_lea.vmem [#allocation2], %s382
        %p384 = pneg %p49
        %p385 = pneg %p46
        %p386 = pneg %p70
        %p387 = pneg %p67
        %p388 = pneg %p91
        %p389 = pneg %p88
        %p390 = pneg %p112
        %p391 = pneg %p109
        %p392 = pneg %p133
        %p393 = pneg %p130
        %p394 = pneg %p154
        %p395 = pneg %p151
        %p396 = pneg %p175
        %p397 = pneg %p172
        %p398 = pneg %p196
        %p399 = pneg %p193
        %p400 = pneg %p217
        %p401 = pneg %p214
        %p402 = pneg %p243
        %p403 = pneg %p240
        %s404 = sand.u32 %s230, 1
        %s405 = scalar_lea.sflag [#allocation4], %s404
        %s406 = sand.u32 %s230, 1
        %s407 = smul.addr %s406, 128
        %s408 = scalar_lea.vmem [#allocation11], %s407
        %s409 = smul.u32 16, %s28
        %s410 = smul.u32 16, %s28
        %v412 = vld [vmem:[%s358] sm:$0xff]
        %v413 = vld [vmem:[%s358 + $0x8] sm:$0xff]
        %v414 = vld [vmem:[%s358 + $0x10] sm:$0xff]
        %v415 = vld [vmem:[%s358 + $0x18] sm:$0xff]
        %v416 = vld [vmem:[%s358 + $0x20] sm:$0xff]
        %v417 = vld [vmem:[%s358 + $0x28] sm:$0xff]
        %v418 = vld [vmem:[%s358 + $0x30] sm:$0xff]
        %v419 = vld [vmem:[%s358 + $0x38] sm:$0xff]
        %v420 = vld [vmem:[%s358 + $0x40] sm:$0xff]
        %v421 = vld [vmem:[%s358 + $0x48] sm:$0xff]
        %v422 = vld [vmem:[%s358 + $0x50] sm:$0xff]
        %v423 = vld [vmem:[%s358 + $0x58] sm:$0xff]
        %v424 = vld [vmem:[%s358 + $0x60] sm:$0xff]
        %v425 = vld [vmem:[%s358 + $0x68] sm:$0xff]
        %v426 = vld [vmem:[%s358 + $0x70] sm:$0xff]
        %v427 = vld [vmem:[%s358 + $0x78] sm:$0xff]
        %v428 = vpack.c.bf16 %v413, %v412
        %v429 = vpack.c.bf16 %v415, %v414
        %v430 = vpack.c.bf16 %v417, %v416
        %v431 = vpack.c.bf16 %v419, %v418
        %v432 = vpack.c.bf16 %v421, %v420
        %v433 = vpack.c.bf16 %v423, %v422
        %v434 = vpack.c.bf16 %v425, %v424
        %v435 = vpack.c.bf16 %v427, %v426
        %v436 = vld [vmem:[#allocation5] sm:$0xf]
        %v437 = vld [vmem:[#allocation5 + $0x4] sm:$0xf]
        %v438 = vld [vmem:[#allocation5 + $0x8] sm:$0xf]
        %v439 = vld [vmem:[#allocation5 + $0xc] sm:$0xf]
        %v440 = vld [vmem:[#allocation5 + $0x10] sm:$0xf]
        %v441 = vld [vmem:[#allocation5 + $0x14] sm:$0xf]
        %v442 = vld [vmem:[#allocation5 + $0x18] sm:$0xf]
        %v443 = vld [vmem:[#allocation5 + $0x1c] sm:$0xf]
        %v444 = vld [vmem:[#allocation5 + $0x20] sm:$0xf]
        %v445 = vld [vmem:[#allocation5 + $0x24] sm:$0xf]
        %v446 = vld [vmem:[#allocation5 + $0x28] sm:$0xf]
        %v447 = vld [vmem:[#allocation5 + $0x2c] sm:$0xf]
        %v448 = vld [vmem:[#allocation5 + $0x30] sm:$0xf]
        %v449 = vld [vmem:[#allocation5 + $0x34] sm:$0xf]
        %v450 = vld [vmem:[#allocation5 + $0x38] sm:$0xf]
        %v451 = vld [vmem:[#allocation5 + $0x3c] sm:$0xf]
        %v452 = vld [vmem:[%s2] sm:$0x1]
        %v454 = vlaneseq
        %v455 = vshrl.u32 %v454, 7
        %v456 = vsub.s32 0, %v455
        %v457 = vrot.slane %v452, %v456
        %v475 = vunpack.c.l.b16 %v436
        %v476 = vunpack.c.l.b16 %v437
        %v477 = vunpack.c.l.b16 %v438
        %v478 = vunpack.c.l.b16 %v439
        %v479 = vunpack.c.l.b16 %v440
        %v480 = vunpack.c.l.b16 %v441
        %v481 = vunpack.c.l.b16 %v442
        %v482 = vunpack.c.l.b16 %v443
        %v483 = vunpack.c.l.b16 %v444
        %v484 = vunpack.c.l.b16 %v445
        %v485 = vunpack.c.l.b16 %v446
        %v486 = vunpack.c.l.b16 %v447
        %v487 = vunpack.c.l.b16 %v448
        %v488 = vunpack.c.l.b16 %v449
        %v489 = vunpack.c.l.b16 %v450
        %v490 = vunpack.c.l.b16 %v451
        %v491 = vpack.c.b16 %v476, %v475
        %v492 = vpack.c.b16 %v478, %v477
        %v493 = vpack.c.b16 %v480, %v479
        %v494 = vpack.c.b16 %v482, %v481
        %v495 = vpack.c.b16 %v484, %v483
        %v496 = vpack.c.b16 %v486, %v485
        %v497 = vpack.c.b16 %v488, %v487
        %v498 = vpack.c.b16 %v490, %v489
        %507 = vmatprep.subr.bf16.mxu0 0
        %508 = vmatpush1.bf16.msra.mxu0 %v498
        %509 = vmatprep.subr.bf16.mxu0 0
        %510 = vmatpush1.bf16.msra.mxu0 %v497
        %511 = vmatprep.subr.bf16.mxu0 0
        %512 = vmatpush1.bf16.msra.mxu0 %v496
        %513 = vmatprep.subr.bf16.mxu0 0
        %514 = vmatpush1.bf16.msra.mxu0 %v495
        %515 = vmatprep.subr.bf16.mxu0 0
        %516 = vmatpush1.bf16.msra.mxu0 %v494
        %517 = vmatprep.subr.bf16.mxu0 0
        %518 = vmatpush1.bf16.msra.mxu0 %v493
        %519 = vmatprep.subr.bf16.mxu0 0
        %520 = vmatpush1.bf16.msra.mxu0 %v492
        %521 = vmatprep.subr.bf16.mxu0 0
        %522 = vmatpush1.bf16.msra.mxu0 %v491
        %523 = vmatprep.subr.bf16.mxu0 0
        %524 = vmatpush2.bf16.msra.mxu0 0
        %525 = vmatprep.subr.bf16.mxu0 0
        %526 = vmatpush2.bf16.msra.mxu0 0
        %527 = vmatprep.subr.bf16.mxu0 0
        %528 = vmatpush2.bf16.msra.mxu0 0
        %529 = vmatprep.subr.bf16.mxu0 0
        %530 = vmatpush2.bf16.msra.mxu0 0
        %531 = vmatprep.subr.bf16.mxu0 0
        %532 = vmatpush2.bf16.msra.mxu0 0
        %533 = vmatprep.subr.bf16.mxu0 0
        %534 = vmatpush2.bf16.msra.mxu0 0
        %535 = vmatprep.subr.bf16.mxu0 0
        %536 = vmatpush2.bf16.msra.mxu0 0
        %537 = vmatprep.subr.bf16.mxu0 0
        %538 = vmatpush2.bf16.msra.mxu0 0
        %539 = vmatprep.mubr.bf16.mxu0 0
        %540 = vmatmul.mubr.bf16.gmra.mxu0 %v428
        %v541 = vpop.f32.mrf.mxu0
        %v542 = vadd.f32 %v457, %v541
        %v543 = vpop.f32.mrf.mxu0
        %v544 = vpop.f32.mrf.mxu0
        %v545 = vadd.f32 %v457, %v544
        %v546 = vpop.f32.mrf.mxu0
        %547 = vmatprep.mubr.bf16.mxu0 0
        %548 = vmatmul.mubr.bf16.gmra.mxu0 %v429
        %v549 = vpop.f32.mrf.mxu0
        %v550 = vadd.f32 %v457, %v549
        %v551 = vpop.f32.mrf.mxu0
        %v552 = vpop.f32.mrf.mxu0
        %v553 = vadd.f32 %v457, %v552
        %v554 = vpop.f32.mrf.mxu0
        %555 = vmatprep.mubr.bf16.mxu0 0
        %556 = vmatmul.mubr.bf16.gmra.mxu0 %v430
        %v557 = vpop.f32.mrf.mxu0
        %v558 = vadd.f32 %v457, %v557
        %v559 = vpop.f32.mrf.mxu0
        %v560 = vpop.f32.mrf.mxu0
        %v561 = vadd.f32 %v457, %v560
        %v562 = vpop.f32.mrf.mxu0
        %563 = vmatprep.mubr.bf16.mxu0 0
        %564 = vmatmul.mubr.bf16.gmra.mxu0 %v431
        %v565 = vpop.f32.mrf.mxu0
        %v566 = vadd.f32 %v457, %v565
        %v567 = vpop.f32.mrf.mxu0
        %v568 = vpop.f32.mrf.mxu0
        %v569 = vadd.f32 %v457, %v568
        %v570 = vpop.f32.mrf.mxu0
        %571 = vmatprep.mubr.bf16.mxu0 0
        %572 = vmatmul.mubr.bf16.gmra.mxu0 %v432
        %v573 = vpop.f32.mrf.mxu0
        %v574 = vadd.f32 %v457, %v573
        %v575 = vpop.f32.mrf.mxu0
        %v576 = vpop.f32.mrf.mxu0
        %v577 = vadd.f32 %v457, %v576
        %v578 = vpop.f32.mrf.mxu0
        %579 = vmatprep.mubr.bf16.mxu0 0
        %580 = vmatmul.mubr.bf16.gmra.mxu0 %v433
        %v581 = vpop.f32.mrf.mxu0
        %v582 = vadd.f32 %v457, %v581
        %v583 = vpop.f32.mrf.mxu0
        %v584 = vpop.f32.mrf.mxu0
        %v585 = vadd.f32 %v457, %v584
        %v586 = vpop.f32.mrf.mxu0
        %587 = vmatprep.mubr.bf16.mxu0 0
        %588 = vmatmul.mubr.bf16.gmra.mxu0 %v434
        %v589 = vpop.f32.mrf.mxu0
        %v590 = vadd.f32 %v457, %v589
        %v591 = vpop.f32.mrf.mxu0
        %v592 = vpop.f32.mrf.mxu0
        %v593 = vadd.f32 %v457, %v592
        %v594 = vpop.f32.mrf.mxu0
        %595 = vmatprep.mubr.bf16.mxu0 0
        %596 = vmatmul.mubr.bf16.gmra.mxu0 %v435
        %v597 = vpop.f32.mrf.mxu0
        %v598 = vadd.f32 %v457, %v597
        %v599 = vpop.f32.mrf.mxu0
        %v600 = vpop.f32.mrf.mxu0
        %v601 = vadd.f32 %v457, %v600
        %v602 = vpop.f32.mrf.mxu0
        %603 = vdwg.mxu0
        %v604 = vmax.f32 %v542, 0.0
        %v605 = vmax.f32 %v545, 0.0
        %v606 = vmax.f32 %v550, 0.0
        %v607 = vmax.f32 %v553, 0.0
        %v608 = vmax.f32 %v558, 0.0
        %v609 = vmax.f32 %v561, 0.0
        %v610 = vmax.f32 %v566, 0.0
        %v611 = vmax.f32 %v569, 0.0
        %v612 = vmax.f32 %v574, 0.0
        %v613 = vmax.f32 %v577, 0.0
        %v614 = vmax.f32 %v582, 0.0
        %v615 = vmax.f32 %v585, 0.0
        %v616 = vmax.f32 %v590, 0.0
        %v617 = vmax.f32 %v593, 0.0
        %v618 = vmax.f32 %v598, 0.0
        %v619 = vmax.f32 %v601, 0.0
        %v620 = vpack.c.bf16 %v605, %v604
        %v621 = vpack.c.bf16 %v607, %v606
        %v622 = vpack.c.bf16 %v609, %v608
        %v623 = vpack.c.bf16 %v611, %v610
        %v624 = vpack.c.bf16 %v613, %v612
        %v625 = vpack.c.bf16 %v615, %v614
        %v626 = vpack.c.bf16 %v617, %v616
        %v627 = vpack.c.bf16 %v619, %v618
        %v628 = vld [vmem:[#allocation7] sm:$0xf]
        %v629 = vld [vmem:[#allocation7 + $0x4] sm:$0xf]
        %v630 = vld [vmem:[#allocation7 + $0x8] sm:$0xf]
        %v631 = vld [vmem:[#allocation7 + $0xc] sm:$0xf]
        %v632 = vld [vmem:[#allocation7 + $0x10] sm:$0xf]
        %v633 = vld [vmem:[#allocation7 + $0x14] sm:$0xf]
        %v634 = vld [vmem:[#allocation7 + $0x18] sm:$0xf]
        %v635 = vld [vmem:[#allocation7 + $0x1c] sm:$0xf]
        %v636 = vld [vmem:[#allocation7 + $0x20] sm:$0xf]
        %v637 = vld [vmem:[#allocation7 + $0x24] sm:$0xf]
        %v638 = vld [vmem:[#allocation7 + $0x28] sm:$0xf]
        %v639 = vld [vmem:[#allocation7 + $0x2c] sm:$0xf]
        %v640 = vld [vmem:[#allocation7 + $0x30] sm:$0xf]
        %v641 = vld [vmem:[#allocation7 + $0x34] sm:$0xf]
        %v642 = vld [vmem:[#allocation7 + $0x38] sm:$0xf]
        %v643 = vld [vmem:[#allocation7 + $0x3c] sm:$0xf]
        %v644 = vld [vmem:[%s4] sm:$0x1]
        %v646 = vlaneseq
        %v647 = vshrl.u32 %v646, 7
        %v648 = vsub.s32 0, %v647
        %v649 = vrot.slane %v644, %v648
        %v667 = vunpack.c.l.b16 %v628
        %v668 = vunpack.c.l.b16 %v629
        %v669 = vunpack.c.l.b16 %v630
        %v670 = vunpack.c.l.b16 %v631
        %v671 = vunpack.c.l.b16 %v632
        %v672 = vunpack.c.l.b16 %v633
        %v673 = vunpack.c.l.b16 %v634
        %v674 = vunpack.c.l.b16 %v635
        %v675 = vunpack.c.l.b16 %v636
        %v676 = vunpack.c.l.b16 %v637
        %v677 = vunpack.c.l.b16 %v638
        %v678 = vunpack.c.l.b16 %v639
        %v679 = vunpack.c.l.b16 %v640
        %v680 = vunpack.c.l.b16 %v641
        %v681 = vunpack.c.l.b16 %v642
        %v682 = vunpack.c.l.b16 %v643
        %v683 = vpack.c.b16 %v668, %v667
        %v684 = vpack.c.b16 %v670, %v669
        %v685 = vpack.c.b16 %v672, %v671
        %v686 = vpack.c.b16 %v674, %v673
        %v687 = vpack.c.b16 %v676, %v675
        %v688 = vpack.c.b16 %v678, %v677
        %v689 = vpack.c.b16 %v680, %v679
        %v690 = vpack.c.b16 %v682, %v681
        %699 = vmatprep.subr.bf16.mxu0 0
        %700 = vmatpush1.bf16.msra.mxu0 %v690
        %701 = vmatprep.subr.bf16.mxu0 0
        %702 = vmatpush1.bf16.msra.mxu0 %v689
        %703 = vmatprep.subr.bf16.mxu0 0
        %704 = vmatpush1.bf16.msra.mxu0 %v688
        %705 = vmatprep.subr.bf16.mxu0 0
        %706 = vmatpush1.bf16.msra.mxu0 %v687
        %707 = vmatprep.subr.bf16.mxu0 0
        %708 = vmatpush1.bf16.msra.mxu0 %v686
        %709 = vmatprep.subr.bf16.mxu0 0
        %710 = vmatpush1.bf16.msra.mxu0 %v685
        %711 = vmatprep.subr.bf16.mxu0 0
        %712 = vmatpush1.bf16.msra.mxu0 %v684
        %713 = vmatprep.subr.bf16.mxu0 0
        %714 = vmatpush1.bf16.msra.mxu0 %v683
        %715 = vmatprep.subr.bf16.mxu0 0
        %716 = vmatpush2.bf16.msra.mxu0 0
        %717 = vmatprep.subr.bf16.mxu0 0
        %718 = vmatpush2.bf16.msra.mxu0 0
        %719 = vmatprep.subr.bf16.mxu0 0
        %720 = vmatpush2.bf16.msra.mxu0 0
        %721 = vmatprep.subr.bf16.mxu0 0
        %722 = vmatpush2.bf16.msra.mxu0 0
        %723 = vmatprep.subr.bf16.mxu0 0
        %724 = vmatpush2.bf16.msra.mxu0 0
        %725 = vmatprep.subr.bf16.mxu0 0
        %726 = vmatpush2.bf16.msra.mxu0 0
        %727 = vmatprep.subr.bf16.mxu0 0
        %728 = vmatpush2.bf16.msra.mxu0 0
        %729 = vmatprep.subr.bf16.mxu0 0
        %730 = vmatpush2.bf16.msra.mxu0 0
        %731 = vmatprep.mubr.bf16.mxu0 0
        %732 = vmatmul.mubr.bf16.gmra.mxu0 %v620
        %v733 = vpop.f32.mrf.mxu0
        %v734 = vadd.f32 %v649, %v733
        %v735 = vpop.f32.mrf.mxu0
        %v736 = vpop.f32.mrf.mxu0
        %v737 = vadd.f32 %v649, %v736
        %v738 = vpop.f32.mrf.mxu0
        %739 = vmatprep.mubr.bf16.mxu0 0
        %740 = vmatmul.mubr.bf16.gmra.mxu0 %v621
        %v741 = vpop.f32.mrf.mxu0
        %v742 = vadd.f32 %v649, %v741
        %v743 = vpop.f32.mrf.mxu0
        %v744 = vpop.f32.mrf.mxu0
        %v745 = vadd.f32 %v649, %v744
        %v746 = vpop.f32.mrf.mxu0
        %747 = vmatprep.mubr.bf16.mxu0 0
        %748 = vmatmul.mubr.bf16.gmra.mxu0 %v622
        %v749 = vpop.f32.mrf.mxu0
        %v750 = vadd.f32 %v649, %v749
        %v751 = vpop.f32.mrf.mxu0
        %v752 = vpop.f32.mrf.mxu0
        %v753 = vadd.f32 %v649, %v752
        %v754 = vpop.f32.mrf.mxu0
        %755 = vmatprep.mubr.bf16.mxu0 0
        %756 = vmatmul.mubr.bf16.gmra.mxu0 %v623
        %v757 = vpop.f32.mrf.mxu0
        %v758 = vadd.f32 %v649, %v757
        %v759 = vpop.f32.mrf.mxu0
        %v760 = vpop.f32.mrf.mxu0
        %v761 = vadd.f32 %v649, %v760
        %v762 = vpop.f32.mrf.mxu0
        %763 = vmatprep.mubr.bf16.mxu0 0
        %764 = vmatmul.mubr.bf16.gmra.mxu0 %v624
        %v765 = vpop.f32.mrf.mxu0
        %v766 = vadd.f32 %v649, %v765
        %v767 = vpop.f32.mrf.mxu0
        %v768 = vpop.f32.mrf.mxu0
        %v769 = vadd.f32 %v649, %v768
        %v770 = vpop.f32.mrf.mxu0
        %771 = vmatprep.mubr.bf16.mxu0 0
        %772 = vmatmul.mubr.bf16.gmra.mxu0 %v625
        %v773 = vpop.f32.mrf.mxu0
        %v774 = vadd.f32 %v649, %v773
        %v775 = vpop.f32.mrf.mxu0
        %v776 = vpop.f32.mrf.mxu0
        %v777 = vadd.f32 %v649, %v776
        %v778 = vpop.f32.mrf.mxu0
        %779 = vmatprep.mubr.bf16.mxu0 0
        %780 = vmatmul.mubr.bf16.gmra.mxu0 %v626
        %v781 = vpop.f32.mrf.mxu0
        %v782 = vadd.f32 %v649, %v781
        %v783 = vpop.f32.mrf.mxu0
        %v784 = vpop.f32.mrf.mxu0
        %v785 = vadd.f32 %v649, %v784
        %v786 = vpop.f32.mrf.mxu0
        %787 = vmatprep.mubr.bf16.mxu0 0
        %788 = vmatmul.mubr.bf16.gmra.mxu0 %v627
        %v789 = vpop.f32.mrf.mxu0
        %v790 = vadd.f32 %v649, %v789
        %v791 = vpop.f32.mrf.mxu0
        %v792 = vpop.f32.mrf.mxu0
        %v793 = vadd.f32 %v649, %v792
        %v794 = vpop.f32.mrf.mxu0
        %795 = vdwg.mxu0
        %v796 = vmax.f32 %v734, 0.0
        %v797 = vmax.f32 %v737, 0.0
        %v798 = vmax.f32 %v742, 0.0
        %v799 = vmax.f32 %v745, 0.0
        %v800 = vmax.f32 %v750, 0.0
        %v801 = vmax.f32 %v753, 0.0
        %v802 = vmax.f32 %v758, 0.0
        %v803 = vmax.f32 %v761, 0.0
        %v804 = vmax.f32 %v766, 0.0
        %v805 = vmax.f32 %v769, 0.0
        %v806 = vmax.f32 %v774, 0.0
        %v807 = vmax.f32 %v777, 0.0
        %v808 = vmax.f32 %v782, 0.0
        %v809 = vmax.f32 %v785, 0.0
        %v810 = vmax.f32 %v790, 0.0
        %v811 = vmax.f32 %v793, 0.0
        %v812 = vpack.c.bf16 %v797, %v796
        %v813 = vpack.c.bf16 %v799, %v798
        %v814 = vpack.c.bf16 %v801, %v800
        %v815 = vpack.c.bf16 %v803, %v802
        %v816 = vpack.c.bf16 %v805, %v804
        %v817 = vpack.c.bf16 %v807, %v806
        %v818 = vpack.c.bf16 %v809, %v808
        %v819 = vpack.c.bf16 %v811, %v810
        %v820 = vld [vmem:[#allocation8] sm:$0xf]
        %v821 = vld [vmem:[#allocation8 + $0x4] sm:$0xf]
        %v822 = vld [vmem:[#allocation8 + $0x8] sm:$0xf]
        %v823 = vld [vmem:[#allocation8 + $0xc] sm:$0xf]
        %v824 = vld [vmem:[#allocation8 + $0x10] sm:$0xf]
        %v825 = vld [vmem:[#allocation8 + $0x14] sm:$0xf]
        %v826 = vld [vmem:[#allocation8 + $0x18] sm:$0xf]
        %v827 = vld [vmem:[#allocation8 + $0x1c] sm:$0xf]
        %v828 = vld [vmem:[#allocation8 + $0x20] sm:$0xf]
        %v829 = vld [vmem:[#allocation8 + $0x24] sm:$0xf]
        %v830 = vld [vmem:[#allocation8 + $0x28] sm:$0xf]
        %v831 = vld [vmem:[#allocation8 + $0x2c] sm:$0xf]
        %v832 = vld [vmem:[#allocation8 + $0x30] sm:$0xf]
        %v833 = vld [vmem:[#allocation8 + $0x34] sm:$0xf]
        %v834 = vld [vmem:[#allocation8 + $0x38] sm:$0xf]
        %v835 = vld [vmem:[#allocation8 + $0x3c] sm:$0xf]
        %v836 = vld [vmem:[%s6] sm:$0x1]
        %v838 = vlaneseq
        %v839 = vshrl.u32 %v838, 7
        %v840 = vsub.s32 0, %v839
        %v841 = vrot.slane %v836, %v840
        %v859 = vunpack.c.l.b16 %v820
        %v860 = vunpack.c.l.b16 %v821
        %v861 = vunpack.c.l.b16 %v822
        %v862 = vunpack.c.l.b16 %v823
        %v863 = vunpack.c.l.b16 %v824
        %v864 = vunpack.c.l.b16 %v825
        %v865 = vunpack.c.l.b16 %v826
        %v866 = vunpack.c.l.b16 %v827
        %v867 = vunpack.c.l.b16 %v828
        %v868 = vunpack.c.l.b16 %v829
        %v869 = vunpack.c.l.b16 %v830
        %v870 = vunpack.c.l.b16 %v831
        %v871 = vunpack.c.l.b16 %v832
        %v872 = vunpack.c.l.b16 %v833
        %v873 = vunpack.c.l.b16 %v834
        %v874 = vunpack.c.l.b16 %v835
        %v875 = vpack.c.b16 %v860, %v859
        %v876 = vpack.c.b16 %v862, %v861
        %v877 = vpack.c.b16 %v864, %v863
        %v878 = vpack.c.b16 %v866, %v865
        %v879 = vpack.c.b16 %v868, %v867
        %v880 = vpack.c.b16 %v870, %v869
        %v881 = vpack.c.b16 %v872, %v871
        %v882 = vpack.c.b16 %v874, %v873
        %891 = vmatprep.subr.bf16.mxu0 0
        %892 = vmatpush1.bf16.msra.mxu0 %v882
        %893 = vmatprep.subr.bf16.mxu0 0
        %894 = vmatpush1.bf16.msra.mxu0 %v881
        %895 = vmatprep.subr.bf16.mxu0 0
        %896 = vmatpush1.bf16.msra.mxu0 %v880
        %897 = vmatprep.subr.bf16.mxu0 0
        %898 = vmatpush1.bf16.msra.mxu0 %v879
        %899 = vmatprep.subr.bf16.mxu0 0
        %900 = vmatpush1.bf16.msra.mxu0 %v878
        %901 = vmatprep.subr.bf16.mxu0 0
        %902 = vmatpush1.bf16.msra.mxu0 %v877
        %903 = vmatprep.subr.bf16.mxu0 0
        %904 = vmatpush1.bf16.msra.mxu0 %v876
        %905 = vmatprep.subr.bf16.mxu0 0
        %906 = vmatpush1.bf16.msra.mxu0 %v875
        %907 = vmatprep.subr.bf16.mxu0 0
        %908 = vmatpush2.bf16.msra.mxu0 0
        %909 = vmatprep.subr.bf16.mxu0 0
        %910 = vmatpush2.bf16.msra.mxu0 0
        %911 = vmatprep.subr.bf16.mxu0 0
        %912 = vmatpush2.bf16.msra.mxu0 0
        %913 = vmatprep.subr.bf16.mxu0 0
        %914 = vmatpush2.bf16.msra.mxu0 0
        %915 = vmatprep.subr.bf16.mxu0 0
        %916 = vmatpush2.bf16.msra.mxu0 0
        %917 = vmatprep.subr.bf16.mxu0 0
        %918 = vmatpush2.bf16.msra.mxu0 0
        %919 = vmatprep.subr.bf16.mxu0 0
        %920 = vmatpush2.bf16.msra.mxu0 0
        %921 = vmatprep.subr.bf16.mxu0 0
        %922 = vmatpush2.bf16.msra.mxu0 0
        %923 = vmatprep.mubr.bf16.mxu0 0
        %924 = vmatmul.mubr.bf16.gmra.mxu0 %v812
        %v925 = vpop.f32.mrf.mxu0
        %v926 = vadd.f32 %v841, %v925
        %v927 = vpop.f32.mrf.mxu0
        %v928 = vpop.f32.mrf.mxu0
        %v929 = vadd.f32 %v841, %v928
        %v930 = vpop.f32.mrf.mxu0
        %931 = vmatprep.mubr.bf16.mxu0 0
        %932 = vmatmul.mubr.bf16.gmra.mxu0 %v813
        %v933 = vpop.f32.mrf.mxu0
        %v934 = vadd.f32 %v841, %v933
        %v935 = vpop.f32.mrf.mxu0
        %v936 = vpop.f32.mrf.mxu0
        %v937 = vadd.f32 %v841, %v936
        %v938 = vpop.f32.mrf.mxu0
        %939 = vmatprep.mubr.bf16.mxu0 0
        %940 = vmatmul.mubr.bf16.gmra.mxu0 %v814
        %v941 = vpop.f32.mrf.mxu0
        %v942 = vadd.f32 %v841, %v941
        %v943 = vpop.f32.mrf.mxu0
        %v944 = vpop.f32.mrf.mxu0
        %v945 = vadd.f32 %v841, %v944
        %v946 = vpop.f32.mrf.mxu0
        %947 = vmatprep.mubr.bf16.mxu0 0
        %948 = vmatmul.mubr.bf16.gmra.mxu0 %v815
        %v949 = vpop.f32.mrf.mxu0
        %v950 = vadd.f32 %v841, %v949
        %v951 = vpop.f32.mrf.mxu0
        %v952 = vpop.f32.mrf.mxu0
        %v953 = vadd.f32 %v841, %v952
        %v954 = vpop.f32.mrf.mxu0
        %955 = vmatprep.mubr.bf16.mxu0 0
        %956 = vmatmul.mubr.bf16.gmra.mxu0 %v816
        %v957 = vpop.f32.mrf.mxu0
        %v958 = vadd.f32 %v841, %v957
        %v959 = vpop.f32.mrf.mxu0
        %v960 = vpop.f32.mrf.mxu0
        %v961 = vadd.f32 %v841, %v960
        %v962 = vpop.f32.mrf.mxu0
        %963 = vmatprep.mubr.bf16.mxu0 0
        %964 = vmatmul.mubr.bf16.gmra.mxu0 %v817
        %v965 = vpop.f32.mrf.mxu0
        %v966 = vadd.f32 %v841, %v965
        %v967 = vpop.f32.mrf.mxu0
        %v968 = vpop.f32.mrf.mxu0
        %v969 = vadd.f32 %v841, %v968
        %v970 = vpop.f32.mrf.mxu0
        %971 = vmatprep.mubr.bf16.mxu0 0
        %972 = vmatmul.mubr.bf16.gmra.mxu0 %v818
        %v973 = vpop.f32.mrf.mxu0
        %v974 = vadd.f32 %v841, %v973
        %v975 = vpop.f32.mrf.mxu0
        %v976 = vpop.f32.mrf.mxu0
        %v977 = vadd.f32 %v841, %v976
        %v978 = vpop.f32.mrf.mxu0
        %979 = vmatprep.mubr.bf16.mxu0 0
        %980 = vmatmul.mubr.bf16.gmra.mxu0 %v819
        %v981 = vpop.f32.mrf.mxu0
        %v982 = vadd.f32 %v841, %v981
        %v983 = vpop.f32.mrf.mxu0
        %v984 = vpop.f32.mrf.mxu0
        %v985 = vadd.f32 %v841, %v984
        %v986 = vpop.f32.mrf.mxu0
        %987 = vdwg.mxu0
        %v988 = vmax.f32 %v926, 0.0
        %v989 = vmax.f32 %v929, 0.0
        %v990 = vmax.f32 %v934, 0.0
        %v991 = vmax.f32 %v937, 0.0
        %v992 = vmax.f32 %v942, 0.0
        %v993 = vmax.f32 %v945, 0.0
        %v994 = vmax.f32 %v950, 0.0
        %v995 = vmax.f32 %v953, 0.0
        %v996 = vmax.f32 %v958, 0.0
        %v997 = vmax.f32 %v961, 0.0
        %v998 = vmax.f32 %v966, 0.0
        %v999 = vmax.f32 %v969, 0.0
        %v1000 = vmax.f32 %v974, 0.0
        %v1001 = vmax.f32 %v977, 0.0
        %v1002 = vmax.f32 %v982, 0.0
        %v1003 = vmax.f32 %v985, 0.0
        %v1004 = vpack.c.bf16 %v989, %v988
        %v1005 = vpack.c.bf16 %v991, %v990
        %v1006 = vpack.c.bf16 %v993, %v992
        %v1007 = vpack.c.bf16 %v995, %v994
        %v1008 = vpack.c.bf16 %v997, %v996
        %v1009 = vpack.c.bf16 %v999, %v998
        %v1010 = vpack.c.bf16 %v1001, %v1000
        %v1011 = vpack.c.bf16 %v1003, %v1002
        %v1012 = vld [vmem:[#allocation10] sm:$0xf]
        %v1013 = vld [vmem:[#allocation10 + $0x4] sm:$0xf]
        %v1014 = vld [vmem:[#allocation10 + $0x8] sm:$0xf]
        %v1015 = vld [vmem:[#allocation10 + $0xc] sm:$0xf]
        %v1016 = vld [vmem:[#allocation10 + $0x10] sm:$0xf]
        %v1017 = vld [vmem:[#allocation10 + $0x14] sm:$0xf]
        %v1018 = vld [vmem:[#allocation10 + $0x18] sm:$0xf]
        %v1019 = vld [vmem:[#allocation10 + $0x1c] sm:$0xf]
        %v1020 = vld [vmem:[#allocation10 + $0x20] sm:$0xf]
        %v1021 = vld [vmem:[#allocation10 + $0x24] sm:$0xf]
        %v1022 = vld [vmem:[#allocation10 + $0x28] sm:$0xf]
        %v1023 = vld [vmem:[#allocation10 + $0x2c] sm:$0xf]
        %v1024 = vld [vmem:[#allocation10 + $0x30] sm:$0xf]
        %v1025 = vld [vmem:[#allocation10 + $0x34] sm:$0xf]
        %v1026 = vld [vmem:[#allocation10 + $0x38] sm:$0xf]
        %v1027 = vld [vmem:[#allocation10 + $0x3c] sm:$0xf]
        %v1028 = vld [vmem:[%s8] sm:$0x1]
        %v1030 = vlaneseq
        %v1031 = vshrl.u32 %v1030, 7
        %v1032 = vsub.s32 0, %v1031
        %v1033 = vrot.slane %v1028, %v1032
        %v1051 = vunpack.c.l.b16 %v1012
        %v1052 = vunpack.c.l.b16 %v1013
        %v1053 = vunpack.c.l.b16 %v1014
        %v1054 = vunpack.c.l.b16 %v1015
        %v1055 = vunpack.c.l.b16 %v1016
        %v1056 = vunpack.c.l.b16 %v1017
        %v1057 = vunpack.c.l.b16 %v1018
        %v1058 = vunpack.c.l.b16 %v1019
        %v1059 = vunpack.c.l.b16 %v1020
        %v1060 = vunpack.c.l.b16 %v1021
        %v1061 = vunpack.c.l.b16 %v1022
        %v1062 = vunpack.c.l.b16 %v1023
        %v1063 = vunpack.c.l.b16 %v1024
        %v1064 = vunpack.c.l.b16 %v1025
        %v1065 = vunpack.c.l.b16 %v1026
        %v1066 = vunpack.c.l.b16 %v1027
        %v1067 = vpack.c.b16 %v1052, %v1051
        %v1068 = vpack.c.b16 %v1054, %v1053
        %v1069 = vpack.c.b16 %v1056, %v1055
        %v1070 = vpack.c.b16 %v1058, %v1057
        %v1071 = vpack.c.b16 %v1060, %v1059
        %v1072 = vpack.c.b16 %v1062, %v1061
        %v1073 = vpack.c.b16 %v1064, %v1063
        %v1074 = vpack.c.b16 %v1066, %v1065
        %1083 = vmatprep.subr.bf16.mxu0 0
        %1084 = vmatpush1.bf16.msra.mxu0 %v1074
        %1085 = vmatprep.subr.bf16.mxu0 0
        %1086 = vmatpush1.bf16.msra.mxu0 %v1073
        %1087 = vmatprep.subr.bf16.mxu0 0
        %1088 = vmatpush1.bf16.msra.mxu0 %v1072
        %1089 = vmatprep.subr.bf16.mxu0 0
        %1090 = vmatpush1.bf16.msra.mxu0 %v1071
        %1091 = vmatprep.subr.bf16.mxu0 0
        %1092 = vmatpush1.bf16.msra.mxu0 %v1070
        %1093 = vmatprep.subr.bf16.mxu0 0
        %1094 = vmatpush1.bf16.msra.mxu0 %v1069
        %1095 = vmatprep.subr.bf16.mxu0 0
        %1096 = vmatpush1.bf16.msra.mxu0 %v1068
        %1097 = vmatprep.subr.bf16.mxu0 0
        %1098 = vmatpush1.bf16.msra.mxu0 %v1067
        %1099 = vmatprep.subr.bf16.mxu0 0
        %1100 = vmatpush2.bf16.msra.mxu0 0
        %1101 = vmatprep.subr.bf16.mxu0 0
        %1102 = vmatpush2.bf16.msra.mxu0 0
        %1103 = vmatprep.subr.bf16.mxu0 0
        %1104 = vmatpush2.bf16.msra.mxu0 0
        %1105 = vmatprep.subr.bf16.mxu0 0
        %1106 = vmatpush2.bf16.msra.mxu0 0
        %1107 = vmatprep.subr.bf16.mxu0 0
        %1108 = vmatpush2.bf16.msra.mxu0 0
        %1109 = vmatprep.subr.bf16.mxu0 0
        %1110 = vmatpush2.bf16.msra.mxu0 0
        %1111 = vmatprep.subr.bf16.mxu0 0
        %1112 = vmatpush2.bf16.msra.mxu0 0
        %1113 = vmatprep.subr.bf16.mxu0 0
        %1114 = vmatpush2.bf16.msra.mxu0 0
        %1115 = vmatprep.mubr.bf16.mxu0 0
        %1116 = vmatmul.mubr.bf16.gmra.mxu0 %v1004
        %v1117 = vpop.f32.mrf.mxu0
        %v1118 = vadd.f32 %v1033, %v1117
        %v1119 = vpop.f32.mrf.mxu0
        %v1120 = vpop.f32.mrf.mxu0
        %v1121 = vadd.f32 %v1033, %v1120
        %v1122 = vpop.f32.mrf.mxu0
        %1123 = vmatprep.mubr.bf16.mxu0 0
        %1124 = vmatmul.mubr.bf16.gmra.mxu0 %v1005
        %v1125 = vpop.f32.mrf.mxu0
        %v1126 = vadd.f32 %v1033, %v1125
        %v1127 = vpop.f32.mrf.mxu0
        %v1128 = vpop.f32.mrf.mxu0
        %v1129 = vadd.f32 %v1033, %v1128
        %v1130 = vpop.f32.mrf.mxu0
        %1131 = vmatprep.mubr.bf16.mxu0 0
        %1132 = vmatmul.mubr.bf16.gmra.mxu0 %v1006
        %v1133 = vpop.f32.mrf.mxu0
        %v1134 = vadd.f32 %v1033, %v1133
        %v1135 = vpop.f32.mrf.mxu0
        %v1136 = vpop.f32.mrf.mxu0
        %v1137 = vadd.f32 %v1033, %v1136
        %v1138 = vpop.f32.mrf.mxu0
        %1139 = vmatprep.mubr.bf16.mxu0 0
        %1140 = vmatmul.mubr.bf16.gmra.mxu0 %v1007
        %v1141 = vpop.f32.mrf.mxu0
        %v1142 = vadd.f32 %v1033, %v1141
        %v1143 = vpop.f32.mrf.mxu0
        %v1144 = vpop.f32.mrf.mxu0
        %v1145 = vadd.f32 %v1033, %v1144
        %v1146 = vpop.f32.mrf.mxu0
        %1147 = vmatprep.mubr.bf16.mxu0 0
        %1148 = vmatmul.mubr.bf16.gmra.mxu0 %v1008
        %v1149 = vpop.f32.mrf.mxu0
        %v1150 = vadd.f32 %v1033, %v1149
        %v1151 = vpop.f32.mrf.mxu0
        %v1152 = vpop.f32.mrf.mxu0
        %v1153 = vadd.f32 %v1033, %v1152
        %v1154 = vpop.f32.mrf.mxu0
        %1155 = vmatprep.mubr.bf16.mxu0 0
        %1156 = vmatmul.mubr.bf16.gmra.mxu0 %v1009
        %v1157 = vpop.f32.mrf.mxu0
        %v1158 = vadd.f32 %v1033, %v1157
        %v1159 = vpop.f32.mrf.mxu0
        %v1160 = vpop.f32.mrf.mxu0
        %v1161 = vadd.f32 %v1033, %v1160
        %v1162 = vpop.f32.mrf.mxu0
        %1163 = vmatprep.mubr.bf16.mxu0 0
        %1164 = vmatmul.mubr.bf16.gmra.mxu0 %v1010
        %v1165 = vpop.f32.mrf.mxu0
        %v1166 = vadd.f32 %v1033, %v1165
        %v1167 = vpop.f32.mrf.mxu0
        %v1168 = vpop.f32.mrf.mxu0
        %v1169 = vadd.f32 %v1033, %v1168
        %v1170 = vpop.f32.mrf.mxu0
        %1171 = vmatprep.mubr.bf16.mxu0 0
        %1172 = vmatmul.mubr.bf16.gmra.mxu0 %v1011
        %v1173 = vpop.f32.mrf.mxu0
        %v1174 = vadd.f32 %v1033, %v1173
        %v1175 = vpop.f32.mrf.mxu0
        %v1176 = vpop.f32.mrf.mxu0
        %v1177 = vadd.f32 %v1033, %v1176
        %v1178 = vpop.f32.mrf.mxu0
        %1179 = vdwg.mxu0
        %1180 = vmax.xlane.f32.xlu0 %v1118
        %v1181 = vpop.xlane.xlu0 %1180
        %1182 = vmax.xlane.f32.xlu0 %v1121
        %v1183 = vpop.xlane.xlu0 %1182
        %1184 = vmax.xlane.f32.xlu0 %v1126
        %v1185 = vpop.xlane.xlu0 %1184
        %1186 = vmax.xlane.f32.xlu0 %v1129
        %v1187 = vpop.xlane.xlu0 %1186
        %1188 = vmax.xlane.f32.xlu0 %v1134
        %v1189 = vpop.xlane.xlu0 %1188
        %1190 = vmax.xlane.f32.xlu0 %v1137
        %v1191 = vpop.xlane.xlu0 %1190
        %1192 = vmax.xlane.f32.xlu0 %v1142
        %v1193 = vpop.xlane.xlu0 %1192
        %1194 = vmax.xlane.f32.xlu0 %v1145
        %v1195 = vpop.xlane.xlu0 %1194
        %1196 = vmax.xlane.f32.xlu0 %v1150
        %v1197 = vpop.xlane.xlu0 %1196
        %1198 = vmax.xlane.f32.xlu0 %v1153
        %v1199 = vpop.xlane.xlu0 %1198
        %1200 = vmax.xlane.f32.xlu0 %v1158
        %v1201 = vpop.xlane.xlu0 %1200
        %1202 = vmax.xlane.f32.xlu0 %v1161
        %v1203 = vpop.xlane.xlu0 %1202
        %1204 = vmax.xlane.f32.xlu0 %v1166
        %v1205 = vpop.xlane.xlu0 %1204
        %1206 = vmax.xlane.f32.xlu0 %v1169
        %v1207 = vpop.xlane.xlu0 %1206
        %1208 = vmax.xlane.f32.xlu0 %v1174
        %v1209 = vpop.xlane.xlu0 %1208
        %1210 = vmax.xlane.f32.xlu0 %v1177
        %v1211 = vpop.xlane.xlu0 %1210
        %v1212 = vsub.f32 %v1118, %v1181
        %v1213 = vsub.f32 %v1121, %v1183
        %v1214 = vsub.f32 %v1126, %v1185
        %v1215 = vsub.f32 %v1129, %v1187
        %v1216 = vsub.f32 %v1134, %v1189
        %v1217 = vsub.f32 %v1137, %v1191
        %v1218 = vsub.f32 %v1142, %v1193
        %v1219 = vsub.f32 %v1145, %v1195
        %v1220 = vsub.f32 %v1150, %v1197
        %v1221 = vsub.f32 %v1153, %v1199
        %v1222 = vsub.f32 %v1158, %v1201
        %v1223 = vsub.f32 %v1161, %v1203
        %v1224 = vsub.f32 %v1166, %v1205
        %v1225 = vsub.f32 %v1169, %v1207
        %v1226 = vsub.f32 %v1174, %v1209
        %v1227 = vsub.f32 %v1177, %v1211
        %v1228 = vmul.f32 %v1212, 1.442695
        %v1229 = vpow.pop %v1228
        %v1230 = vmul.f32 %v1213, 1.442695
        %v1231 = vpow.pop %v1230
        %v1232 = vmul.f32 %v1214, 1.442695
        %v1233 = vpow.pop %v1232
        %v1234 = vmul.f32 %v1215, 1.442695
        %v1235 = vpow.pop %v1234
        %v1236 = vmul.f32 %v1216, 1.442695
        %v1237 = vpow.pop %v1236
        %v1238 = vmul.f32 %v1217, 1.442695
        %v1239 = vpow.pop %v1238
        %v1240 = vmul.f32 %v1218, 1.442695
        %v1241 = vpow.pop %v1240
        %v1242 = vmul.f32 %v1219, 1.442695
        %v1243 = vpow.pop %v1242
        %v1244 = vmul.f32 %v1220, 1.442695
        %v1245 = vpow.pop %v1244
        %v1246 = vmul.f32 %v1221, 1.442695
        %v1247 = vpow.pop %v1246
        %v1248 = vmul.f32 %v1222, 1.442695
        %v1249 = vpow.pop %v1248
        %v1250 = vmul.f32 %v1223, 1.442695
        %v1251 = vpow.pop %v1250
        %v1252 = vmul.f32 %v1224, 1.442695
        %v1253 = vpow.pop %v1252
        %v1254 = vmul.f32 %v1225, 1.442695
        %v1255 = vpow.pop %v1254
        %v1256 = vmul.f32 %v1226, 1.442695
        %v1257 = vpow.pop %v1256
        %v1258 = vmul.f32 %v1227, 1.442695
        %v1259 = vpow.pop %v1258
        %1260 = vadd.xlane.f32.xlu0 %v1229
        %v1261 = vpop.xlane.xlu0 %1260
        %1262 = vadd.xlane.f32.xlu0 %v1231
        %v1263 = vpop.xlane.xlu0 %1262
        %1264 = vadd.xlane.f32.xlu0 %v1233
        %v1265 = vpop.xlane.xlu0 %1264
        %1266 = vadd.xlane.f32.xlu0 %v1235
        %v1267 = vpop.xlane.xlu0 %1266
        %1268 = vadd.xlane.f32.xlu0 %v1237
        %v1269 = vpop.xlane.xlu0 %1268
        %1270 = vadd.xlane.f32.xlu0 %v1239
        %v1271 = vpop.xlane.xlu0 %1270
        %1272 = vadd.xlane.f32.xlu0 %v1241
        %v1273 = vpop.xlane.xlu0 %1272
        %1274 = vadd.xlane.f32.xlu0 %v1243
        %v1275 = vpop.xlane.xlu0 %1274
        %1276 = vadd.xlane.f32.xlu0 %v1245
        %v1277 = vpop.xlane.xlu0 %1276
        %1278 = vadd.xlane.f32.xlu0 %v1247
        %v1279 = vpop.xlane.xlu0 %1278
        %1280 = vadd.xlane.f32.xlu0 %v1249
        %v1281 = vpop.xlane.xlu0 %1280
        %1282 = vadd.xlane.f32.xlu0 %v1251
        %v1283 = vpop.xlane.xlu0 %1282
        %1284 = vadd.xlane.f32.xlu0 %v1253
        %v1285 = vpop.xlane.xlu0 %1284
        %1286 = vadd.xlane.f32.xlu0 %v1255
        %v1287 = vpop.xlane.xlu0 %1286
        %1288 = vadd.xlane.f32.xlu0 %v1257
        %v1289 = vpop.xlane.xlu0 %1288
        %1290 = vadd.xlane.f32.xlu0 %v1259
        %v1291 = vpop.xlane.xlu0 %1290
        %v1292 = vlog2.pop %v1261
        %v1293 = vmul.f32 %v1292, 0.6931472
        %v1294 = vlog2.pop %v1263
        %v1295 = vmul.f32 %v1294, 0.6931472
        %v1296 = vlog2.pop %v1265
        %v1297 = vmul.f32 %v1296, 0.6931472
        %v1298 = vlog2.pop %v1267
        %v1299 = vmul.f32 %v1298, 0.6931472
        %v1300 = vlog2.pop %v1269
        %v1301 = vmul.f32 %v1300, 0.6931472
        %v1302 = vlog2.pop %v1271
        %v1303 = vmul.f32 %v1302, 0.6931472
        %v1304 = vlog2.pop %v1273
        %v1305 = vmul.f32 %v1304, 0.6931472
        %v1306 = vlog2.pop %v1275
        %v1307 = vmul.f32 %v1306, 0.6931472
        %v1308 = vlog2.pop %v1277
        %v1309 = vmul.f32 %v1308, 0.6931472
        %v1310 = vlog2.pop %v1279
        %v1311 = vmul.f32 %v1310, 0.6931472
        %v1312 = vlog2.pop %v1281
        %v1313 = vmul.f32 %v1312, 0.6931472
        %v1314 = vlog2.pop %v1283
        %v1315 = vmul.f32 %v1314, 0.6931472
        %v1316 = vlog2.pop %v1285
        %v1317 = vmul.f32 %v1316, 0.6931472
        %v1318 = vlog2.pop %v1287
        %v1319 = vmul.f32 %v1318, 0.6931472
        %v1320 = vlog2.pop %v1289
        %v1321 = vmul.f32 %v1320, 0.6931472
        %v1322 = vlog2.pop %v1291
        %v1323 = vmul.f32 %v1322, 0.6931472
        %v1324 = vadd.f32 %v1293, %v1181
        %v1325 = vadd.f32 %v1295, %v1183
        %v1326 = vadd.f32 %v1297, %v1185
        %v1327 = vadd.f32 %v1299, %v1187
        %v1328 = vadd.f32 %v1301, %v1189
        %v1329 = vadd.f32 %v1303, %v1191
        %v1330 = vadd.f32 %v1305, %v1193
        %v1331 = vadd.f32 %v1307, %v1195
        %v1332 = vadd.f32 %v1309, %v1197
        %v1333 = vadd.f32 %v1311, %v1199
        %v1334 = vadd.f32 %v1313, %v1201
        %v1335 = vadd.f32 %v1315, %v1203
        %v1336 = vadd.f32 %v1317, %v1205
        %v1337 = vadd.f32 %v1319, %v1207
        %v1338 = vadd.f32 %v1321, %v1209
        %v1339 = vadd.f32 %v1323, %v1211
        %v1340 = vsub.f32 %v1118, %v1324
        %v1341 = vsub.f32 %v1121, %v1325
        %v1342 = vsub.f32 %v1126, %v1326
        %v1343 = vsub.f32 %v1129, %v1327
        %v1344 = vsub.f32 %v1134, %v1328
        %v1345 = vsub.f32 %v1137, %v1329
        %v1346 = vsub.f32 %v1142, %v1330
        %v1347 = vsub.f32 %v1145, %v1331
        %v1348 = vsub.f32 %v1150, %v1332
        %v1349 = vsub.f32 %v1153, %v1333
        %v1350 = vsub.f32 %v1158, %v1334
        %v1351 = vsub.f32 %v1161, %v1335
        %v1352 = vsub.f32 %v1166, %v1336
        %v1353 = vsub.f32 %v1169, %v1337
        %v1354 = vsub.f32 %v1174, %v1338
        %v1355 = vsub.f32 %v1177, %v1339
        %1356 = vst [vmem:[%s408] sm:$0xff] %v1340
        %1357 = vst [vmem:[%s408 + $0x8] sm:$0xff] %v1341
        %1358 = vst [vmem:[%s408 + $0x10] sm:$0xff] %v1342
        %1359 = vst [vmem:[%s408 + $0x18] sm:$0xff] %v1343
        %1360 = vst [vmem:[%s408 + $0x20] sm:$0xff] %v1344
        %1361 = vst [vmem:[%s408 + $0x28] sm:$0xff] %v1345
        %1362 = vst [vmem:[%s408 + $0x30] sm:$0xff] %v1346
        %1363 = vst [vmem:[%s408 + $0x38] sm:$0xff] %v1347
        %1364 = vst [vmem:[%s408 + $0x40] sm:$0xff] %v1348
        %1365 = vst [vmem:[%s408 + $0x48] sm:$0xff] %v1349
        %1366 = vst [vmem:[%s408 + $0x50] sm:$0xff] %v1350
        %1367 = vst [vmem:[%s408 + $0x58] sm:$0xff] %v1351
        %1368 = vst [vmem:[%s408 + $0x60] sm:$0xff] %v1352
        %1369 = vst [vmem:[%s408 + $0x68] sm:$0xff] %v1353
        %1370 = vst [vmem:[%s408 + $0x70] sm:$0xff] %v1354
        %1371 = vst [vmem:[%s408 + $0x78] sm:$0xff] %v1355
        %s1372 = sand.u32 %s230, 1
        %s1373 = scalar_lea.sflag [#allocation4], %s1372
        %s1374 = sand.u32 %s230, 1
        %s1375 = smul.addr %s1374, 128
        %s1376 = scalar_lea.vmem [#allocation11], %s1375
        // Predicated region
        $region77: #{tpu_custom_call.1} parent=55 // pred_check
          %p1377 = pneg %p240
        $region78: #{tpu_custom_call.1} parent=55 // pred_check_branch
          %1379 = sbr.rel (%p1377) target = $region80
        $region79: #{tpu_custom_call.1} parent=55 // pred_region
          %s1380 = smul.u32 16, %s28
          %s1382 = ssub.s32 2048, 2048
          %1383 = vsyncadd %s1373, %s1382
          %s1384 = smul.addr %s1380, 128
          %s1385 = scalar_lea.hbm %s9, %s1384
          %s1386 = sshll.u32 %s1376, 4
          %s1387 = int_to_ptr.vmem [resolvable:$true] %s1386
          %1392 = dma.vmem_to_hbm [thread:$0]  %s1387, 2048, %s1385, %s1373, 128, 128, 8
        $region80: #{tpu_custom_call.1} parent=55 // pred_fallthru
          _
      $region56: #{tpu_custom_call.1} parent=5 // pred_fallthru
        _
      %p1393 = scmp.le.s32.totalorder 2, %s23
      // Predicated region
      $region81: #{tpu_custom_call.1} parent=5 // pred_check
        %p1394 = pneg %p1393
      $region82: #{tpu_custom_call.1} parent=5 // pred_check_branch
        %1396 = sbr.rel (%p1394) target = $region84
      $region83: #{tpu_custom_call.1} parent=5 // pred_region
        %s1397 = ssub.s32 %s23, 2
        // Predicated region
        $region85: #{tpu_custom_call.1} parent=83 // pred_check
          %p1398 = pneg %p246
        $region86: #{tpu_custom_call.1} parent=83 // pred_check_branch
          %1400 = sbr.rel (%p1398) target = $region88
        $region87: #{tpu_custom_call.1} parent=83 // pred_region
          %s1401 = sand.u32 %s231, 1
          %s1402 = scalar_lea.sflag [#allocation4], %s1401
          %s1403 = sand.u32 %s231, 1
          %s1404 = smul.addr %s1403, 128
          %s1405 = scalar_lea.vmem [#allocation11], %s1404
          %1406 = dma.done %s1402, 2048
        $region88: #{tpu_custom_call.1} parent=83 // pred_fallthru
          _
      $region84: #{tpu_custom_call.1} parent=5 // pred_fallthru
        _
    $region6: #{tpu_custom_call.1} parent=1 // loop_footer
      %s27 = sadd.s32 1, %s23
    $region7: #{tpu_custom_call.1} parent=1 // loop_footer_branch
      %22 = sbr.rel target = $region3
    $region8: #{tpu_custom_call.1} parent=1 // loop_exit
      _
    %1407 = vsyncpa [#allocation3], 1
    %s1408 = scalar_lea.sflag [#allocation3], 1
    %1409 = vsyncpa %s1408, 1
    %1410 = vsyncpa [#allocation6], 1
    %1411 = vsyncpa [#allocation9], 1
    %1412 = vsyncpa [#allocation4], 1
    %s1413 = scalar_lea.sflag [#allocation4], 1
    %1414 = vsyncpa %s1413, 1

</llo_original>
